<compile_context>
chip_gen: v5e
topology: v5e:2x2
jax: 0.10.0
libtpu: 0.0.40
codegen_flags: <defaults>
</compile_context>

<pallas_src>
import functools

import jax
import jax.numpy as jnp
from jax.experimental import pallas as pl
from jax.experimental.pallas import tpu as pltpu

_BN_EPS = 1e-5


def _stage(xbuf_ref, w_ref, gamma_ref, beta_ref, gmat, gmat_t, inv_n, eps):
    """One conv3x3 + BN(batch stats) + ReLU stage.

    xbuf_ref : (N, H+2, W*Cin) f32 scratch; rows 1..H hold data, rows 0/H+1 zero
    w_ref    : (3, W*Cin, W*Cout) bf16 block-banded weights (one per kernel row)
    gamma_ref, beta_ref : (1, Cout) f32
    gmat     : (W*Cout, Cout) 0/1 lane->channel gather matrix
    gmat_t   : (Cout, W*Cout) channel->lane broadcast matrix
    returns  : (N*H, W*Cout) f32 activation
    """
    n, hp2, wcin = xbuf_ref.shape
    h = hp2 - 2
    wcout = w_ref.shape[2]

    x2d = xbuf_ref[...].reshape(n * hp2, wcin).astype(jnp.bfloat16)

    # Three kernel-row matmuls on the MXU, f32 accumulation.
    s0 = jnp.dot(x2d, w_ref[0], preferred_element_type=jnp.float32)
    s1 = jnp.dot(x2d, w_ref[1], preferred_element_type=jnp.float32)
    s2 = jnp.dot(x2d, w_ref[2], preferred_element_type=jnp.float32)
    s0 = s0.reshape(n, hp2, wcout)
    s1 = s1.reshape(n, hp2, wcout)
    s2 = s2.reshape(n, hp2, wcout)
    # Output row h reads padded input rows h, h+1, h+2 (kernel rows 0, 1, 2).
    conv = s0[:, 0:h] + s1[:, 1:h + 1] + s2[:, 2:h + 2]       # (N, H, W*Cout)
    conv2d = conv.reshape(n * h, wcout)

    # --- BatchNorm2d, train mode, single pass (sum & sum-of-squares) ---------
    lane_sum = jnp.sum(conv2d, axis=0, keepdims=True)                    # (1, W*Cout)
    lane_ssq = jnp.sum(conv2d * conv2d, axis=0, keepdims=True)           # (1, W*Cout)
    ch_sum = jnp.dot(lane_sum, gmat, preferred_element_type=jnp.float32)  # (1, Cout)
    ch_ssq = jnp.dot(lane_ssq, gmat, preferred_element_type=jnp.float32)  # (1, Cout)
    mean = ch_sum * inv_n
    var = ch_ssq * inv_n - mean * mean          # biased (train-mode) variance
    scale_c = gamma_ref[...] * jax.lax.rsqrt(var + eps)                  # (1, Cout)
    shift_c = beta_ref[...] - mean * scale_c                             # (1, Cout)
    # Broadcast per-channel scale/shift back onto the packed (w, c) lane axis.
    scale_l = jnp.dot(scale_c, gmat_t, preferred_element_type=jnp.float32)
    shift_l = jnp.dot(shift_c, gmat_t, preferred_element_type=jnp.float32)

    return jnp.maximum(conv2d * scale_l + shift_l, 0.0)                  # ReLU


def _unet_block_kernel(x_ref, w1_ref, g1_ref, b1_ref, w2_ref, g2_ref, b2_ref,
                       out_ref, xbuf1_ref, xbuf2_ref, *, eps):
    n, h, wcout = out_ref.shape
    cout = g1_ref.shape[-1]

    # 0/1 matrices mapping packed lane index (w*Cout + c) <-> channel c.
    lane_c = jax.lax.broadcasted_iota(jnp.int32, (wcout, cout), 0) % cout
    col_c = jax.lax.broadcasted_iota(jnp.int32, (wcout, cout), 1)
    gmat = (lane_c == col_c).astype(jnp.float32)                 # (W*Cout, Cout)
    row_c = jax.lax.broadcasted_iota(jnp.int32, (cout, wcout), 0)
    lane_c_t = jax.lax.broadcasted_iota(jnp.int32, (cout, wcout), 1) % cout
    gmat_t = (row_c == lane_c_t).astype(jnp.float32)             # (Cout, W*Cout)

    inv_n = 1.0 / float(n * h * (wcout // cout))                 # 1 / (N*H*W)

    # ---- stage 1: H-pad the input into VMEM scratch, then conv+BN+ReLU ------
    xbuf1_ref[...] = jnp.zeros_like(xbuf1_ref)
    xbuf1_ref[:, 1:h + 1, :] = x_ref[...]
    y1 = _stage(xbuf1_ref, w1_ref, g1_ref, b1_ref, gmat, gmat_t, inv_n, eps)

    # ---- stage 2: stage-1 activation stays in VMEM (no HBM roundtrip) -------
    xbuf2_ref[...] = jnp.zeros_like(xbuf2_ref)
    xbuf2_ref[:, 1:h + 1, :] = y1.reshape(n, h, wcout)
    y2 = _stage(xbuf2_ref, w2_ref, g2_ref, b2_ref, gmat, gmat_t, inv_n, eps)

    out_ref[...] = y2.reshape(n, h, wcout)


def _make_banded_weights(w_oihw, width):
    """(Cout, Cin, 3, 3) conv weight -> (3, W*Cin, W*Cout) bf16 block-banded
    matrices (one per kernel row); SAME padding along W is encoded as zeros."""
    c_out, c_in, kh, kw = w_oihw.shape
    assert kh == 3 and kw == 3
    w = jnp.transpose(w_oihw, (2, 3, 1, 0))                  # (dh, kw, Cin, Cout)
    off = jnp.arange(width)[:, None] - jnp.arange(width)[None, :] + 1  # w_in - w_out + 1
    valid = (off >= 0) & (off <= 2)
    g = w[:, jnp.clip(off, 0, 2)]                            # (3, W_in, W_out, Cin, Cout)
    g = jnp.where(valid[None, :, :, None, None], g, 0.0)
    g = jnp.transpose(g, (0, 1, 3, 2, 4))                    # (3, W_in, Cin, W_out, Cout)
    return g.reshape(3, width * c_in, width * c_out).astype(jnp.bfloat16)


def init_unet_block_params(key, in_channels, out_channels):
    """Parameters mirroring nn.Conv2d / nn.BatchNorm2d.  Conv biases are omitted:
    a per-channel constant before train-mode BN is exactly cancelled by the
    batch-mean subtraction, so the forward output is unchanged."""
    k1, k2 = jax.random.split(key)
    b1 = 1.0 / (in_channels * 9) ** 0.5
    b2 = 1.0 / (out_channels * 9) ** 0.5
    return {
        "w1": jax.random.uniform(k1, (out_channels, in_channels, 3, 3),
                                 jnp.float32, -b1, b1),
        "gamma1": jnp.ones((out_channels,), jnp.float32),
        "beta1": jnp.zeros((out_channels,), jnp.float32),
        "w2": jax.random.uniform(k2, (out_channels, out_channels, 3, 3),
                                 jnp.float32, -b2, b2),
        "gamma2": jnp.ones((out_channels,), jnp.float32),
        "beta2": jnp.zeros((out_channels,), jnp.float32),
    }


def prepare_unet_block_params(params, width):
    """One-time weight prep (pre-banded bf16 conv weights, (1,Cout) BN params)."""
    c_out = params["w1"].shape[0]
    return {
        "w1b": _make_banded_weights(params["w1"], width),
        "w2b": _make_banded_weights(params["w2"], width),
        "gamma1": params["gamma1"].reshape(1, c_out).astype(jnp.float32),
        "beta1": params["beta1"].reshape(1, c_out).astype(jnp.float32),
        "gamma2": params["gamma2"].reshape(1, c_out).astype(jnp.float32),
        "beta2": params["beta2"].reshape(1, c_out).astype(jnp.float32),
    }


@jax.jit
def unet_block_forward(x_nhwc, kparams):
    """UNetBlock.forward (NHWC in / NHWC out), fused into one Pallas kernel."""
    n, h, w, c_in = x_nhwc.shape
    c_out = kparams["gamma1"].shape[-1]
    assert kparams["w1b"].shape[1] == w * c_in, "weights prepared for wrong width"
    x_packed = x_nhwc.reshape(n, h, w * c_in)       # lane-packed (w, c), free reshape

    rows = n * (h + 2)
    flops = (2 * rows * (w * c_in) * (w * c_out) * 3
             + 2 * rows * (w * c_out) * (w * c_out) * 3
             + 12 * n * h * w * c_out)
    bytes_accessed = (x_packed.size * 4
                      + kparams["w1b"].size * 2 + kparams["w2b"].size * 2
                      + n * h * w * c_out * 4 + 8 * c_out * 4)
    vmem = pl.BlockSpec(memory_space=pltpu.MemorySpace.VMEM)

    out = pl.pallas_call(
        functools.partial(_unet_block_kernel, eps=_BN_EPS),
        out_shape=jax.ShapeDtypeStruct((n, h, w * c_out), jnp.float32),
        in_specs=[vmem] * 7,
        out_specs=vmem,
        scratch_shapes=[
            pltpu.VMEM((n, h + 2, w * c_in), jnp.float32),    # stage-1 H-padded input
            pltpu.VMEM((n, h + 2, w * c_out), jnp.float32),   # stage-2 H-padded input
        ],
        compiler_params=pltpu.CompilerParams(vmem_limit_bytes=32 * 1024 * 1024),
        cost_estimate=pl.CostEstimate(flops=flops, transcendentals=2 * c_out,
                                      bytes_accessed=bytes_accessed),
    )(x_packed, kparams["w1b"], kparams["gamma1"], kparams["beta1"],
      kparams["w2b"], kparams["gamma2"], kparams["beta2"])
    return out.reshape(n, h, w, c_out)


def unet_block_reference(x_nhwc, params, eps=_BN_EPS):
    """Pure-JAX (XLA) reference of the PyTorch UNetBlock forward, NHWC, f32."""
    def stage(x, w_oihw, gamma, beta):
        w_hwio = jnp.transpose(w_oihw, (2, 3, 1, 0))
        y = jax.lax.conv_general_dilated(
            x, w_hwio, (1, 1), "SAME",
            dimension_numbers=("NHWC", "HWIO", "NHWC"))
        mean = jnp.mean(y, axis=(0, 1, 2))
        var = jnp.mean(jnp.square(y - mean), axis=(0, 1, 2))
        return jnp.maximum(gamma * (y - mean) * jax.lax.rsqrt(var + eps) + beta, 0.0)

    y = stage(x_nhwc, params["w1"], params["gamma1"], params["beta1"])
    return stage(y, params["w2"], params["gamma2"], params["beta2"])


if __name__ == "__main__":
    key = jax.random.PRNGKey(0)
    kx, kp = jax.random.split(key)

    batch, in_ch, out_ch, size = 2, 4, 8, 16
    x = jax.random.normal(kx, (batch, size, size, in_ch), jnp.float32)   # NHWC
    params = init_unet_block_params(kp, in_ch, out_ch)
    kparams = prepare_unet_block_params(params, size)   # one-time weight prep

    out = jax.block_until_ready(unet_block_forward(x, kparams))
    assert out.shape == (batch, size, size, out_ch), out.shape
    assert bool(jnp.all(jnp.isfinite(out))), "non-finite output"

    # Correctness check vs a pure-JAX f32 reference (kernel uses bf16 matmuls).
    ref = jax.block_until_ready(unet_block_reference(x, params))
    max_err = float(jnp.max(jnp.abs(out - ref)))
    assert max_err < 0.15, f"mismatch vs reference: max abs err {max_err}"

    print("KERNEL_OK")
</pallas_src>

<mosaic_0001>
module attributes {stable_mosaic.version = 11 : i64} {
  func.func @_unet_block_kernel(%arg0: memref<2x16x64xf32, #tpu.memory_space<vmem>>, %arg1: memref<3x64x128xbf16, #tpu.memory_space<vmem>>, %arg2: memref<1x8xf32, #tpu.memory_space<vmem>>, %arg3: memref<1x8xf32, #tpu.memory_space<vmem>>, %arg4: memref<3x128x128xbf16, #tpu.memory_space<vmem>>, %arg5: memref<1x8xf32, #tpu.memory_space<vmem>>, %arg6: memref<1x8xf32, #tpu.memory_space<vmem>>, %arg7: memref<2x16x128xf32, #tpu.memory_space<vmem>>, %arg8: memref<2x18x64xf32, #tpu.memory_space<vmem>>, %arg9: memref<2x18x128xf32, #tpu.memory_space<vmem>>) attributes {dimension_semantics = [], scalar_prefetch = 0 : i64, scratch_operands = 2 : i64, tpu.core_type = #tpu.core_type<tc>} {
    %0 = tpu.iota {dimensions = array<i32: 0>} : vector<128x8xi32>
    %c8_i32 = arith.constant 8 : i32
    %c0_i32 = arith.constant 0 : i32
    %1 = arith.cmpi eq, %c8_i32, %c0_i32 : i32
    %c1_i32 = arith.constant 1 : i32
    %2 = arith.select %1, %c1_i32, %c8_i32 : i32
    %3 = vector.broadcast %2 : i32 to vector<128x8xi32>
    %4 = arith.remsi %0, %3 : vector<128x8xi32>
    %c0_i32_0 = arith.constant 0 : i32
    %5 = vector.broadcast %c0_i32_0 : i32 to vector<128x8xi32>
    %6 = arith.cmpi ne, %4, %5 : vector<128x8xi32>
    %c0_i32_1 = arith.constant 0 : i32
    %7 = vector.broadcast %c0_i32_1 : i32 to vector<128x8xi32>
    %8 = arith.cmpi slt, %4, %7 : vector<128x8xi32>
    %c0_i32_2 = arith.constant 0 : i32
    %9 = arith.cmpi slt, %2, %c0_i32_2 : i32
    %10 = vector.broadcast %9 : i1 to vector<128x8xi1>
    %11 = vector.broadcast %10 : vector<128x8xi1> to vector<128x8xi1>
    %12 = arith.xori %8, %11 : vector<128x8xi1>
    %13 = arith.andi %12, %6 : vector<128x8xi1>
    %14 = vector.broadcast %2 : i32 to vector<128x8xi32>
    %15 = arith.addi %4, %14 : vector<128x8xi32>
    %16 = arith.select %13, %15, %4 : vector<128x8xi1>, vector<128x8xi32>
    %17 = tpu.iota {dimensions = array<i32: 1>} : vector<128x8xi32>
    %18 = arith.cmpi eq, %16, %17 : vector<128x8xi32>
    %19 = arith.extui %18 : vector<128x8xi1> to vector<128x8xi32>
    %20 = arith.sitofp %19 : vector<128x8xi32> to vector<128x8xf32>
    %21 = tpu.iota {dimensions = array<i32: 0>} : vector<8x128xi32>
    %22 = tpu.iota {dimensions = array<i32: 1>} : vector<8x128xi32>
    %c8_i32_3 = arith.constant 8 : i32
    %c0_i32_4 = arith.constant 0 : i32
    %23 = arith.cmpi eq, %c8_i32_3, %c0_i32_4 : i32
    %c1_i32_5 = arith.constant 1 : i32
    %24 = arith.select %23, %c1_i32_5, %c8_i32_3 : i32
    %25 = vector.broadcast %24 : i32 to vector<8x128xi32>
    %26 = arith.remsi %22, %25 : vector<8x128xi32>
    %c0_i32_6 = arith.constant 0 : i32
    %27 = vector.broadcast %c0_i32_6 : i32 to vector<8x128xi32>
    %28 = arith.cmpi ne, %26, %27 : vector<8x128xi32>
    %c0_i32_7 = arith.constant 0 : i32
    %29 = vector.broadcast %c0_i32_7 : i32 to vector<8x128xi32>
    %30 = arith.cmpi slt, %26, %29 : vector<8x128xi32>
    %c0_i32_8 = arith.constant 0 : i32
    %31 = arith.cmpi slt, %24, %c0_i32_8 : i32
    %32 = vector.broadcast %31 : i1 to vector<8x128xi1>
    %33 = vector.broadcast %32 : vector<8x128xi1> to vector<8x128xi1>
    %34 = arith.xori %30, %33 : vector<8x128xi1>
    %35 = arith.andi %34, %28 : vector<8x128xi1>
    %36 = vector.broadcast %24 : i32 to vector<8x128xi32>
    %37 = arith.addi %26, %36 : vector<8x128xi32>
    %38 = arith.select %35, %37, %26 : vector<8x128xi1>, vector<8x128xi32>
    %39 = arith.cmpi eq, %21, %38 : vector<8x128xi32>
    %40 = arith.extui %39 : vector<8x128xi1> to vector<8x128xi32>
    %41 = arith.sitofp %40 : vector<8x128xi32> to vector<8x128xf32>
    %cst = arith.constant 0.000000e+00 : f32
    %42 = vector.broadcast %cst : f32 to vector<2x18x64xf32>
    %c0 = arith.constant 0 : index
    %c0_9 = arith.constant 0 : index
    %c0_10 = arith.constant 0 : index
    %43 = vector.load %arg8[%c0, %c0_9, %c0_10] : memref<2x18x64xf32, #tpu.memory_space<vmem>>, vector<2x18x64xf32>
    tpu.vector_store %arg8[%c0, %c0_9, %c0_10], %42 {strides = array<i32>} : memref<2x18x64xf32, #tpu.memory_space<vmem>>, vector<2x18x64xf32>,
    %c0_11 = arith.constant 0 : index
    %c0_12 = arith.constant 0 : index
    %c0_13 = arith.constant 0 : index
    %44 = vector.load %arg0[%c0_11, %c0_12, %c0_13] : memref<2x16x64xf32, #tpu.memory_space<vmem>>, vector<2x16x64xf32>
    %c0_14 = arith.constant 0 : index
    %c1 = arith.constant 1 : index
    %c0_15 = arith.constant 0 : index
    %45 = vector.load %arg8[%c0_14, %c1, %c0_15] : memref<2x18x64xf32, #tpu.memory_space<vmem>>, vector<2x16x64xf32>
    tpu.vector_store %arg8[%c0_14, %c1, %c0_15], %44 {strides = array<i32>} : memref<2x18x64xf32, #tpu.memory_space<vmem>>, vector<2x16x64xf32>,
    %c0_16 = arith.constant 0 : index
    %c0_17 = arith.constant 0 : index
    %c0_18 = arith.constant 0 : index
    %46 = vector.load %arg8[%c0_16, %c0_17, %c0_18] : memref<2x18x64xf32, #tpu.memory_space<vmem>>, vector<2x18x64xf32>
    %47 = vector.shape_cast %46 : vector<2x18x64xf32> to vector<36x64xf32>
    %48 = arith.truncf %47 : vector<36x64xf32> to vector<36x64xbf16>
    %c0_19 = arith.constant 0 : index
    %c0_20 = arith.constant 0 : index
    %c0_21 = arith.constant 0 : index
    %49 = vector.load %arg1[%c0_19, %c0_20, %c0_21] : memref<3x64x128xbf16, #tpu.memory_space<vmem>>, vector<1x64x128xbf16>
    %50 = vector.shape_cast %49 : vector<1x64x128xbf16> to vector<64x128xbf16>
    %cst_22 = arith.constant dense<0.000000e+00> : vector<36x128xf32>
    %51 = tpu.matmul %48, %50, %cst_22 {dimension_numbers = #tpu.dot_dimension_numbers<[1], [0], [0], [1], [0, 0, 1, 1], [], []>} : vector<36x64xbf16>, vector<64x128xbf16>, vector<36x128xf32> -> vector<36x128xf32>
    %c1_23 = arith.constant 1 : index
    %c0_24 = arith.constant 0 : index
    %c0_25 = arith.constant 0 : index
    %52 = vector.load %arg1[%c1_23, %c0_24, %c0_25] : memref<3x64x128xbf16, #tpu.memory_space<vmem>>, vector<1x64x128xbf16>
    %53 = vector.shape_cast %52 : vector<1x64x128xbf16> to vector<64x128xbf16>
    %cst_26 = arith.constant dense<0.000000e+00> : vector<36x128xf32>
    %54 = tpu.matmul %48, %53, %cst_26 {dimension_numbers = #tpu.dot_dimension_numbers<[1], [0], [0], [1], [0, 0, 1, 1], [], []>} : vector<36x64xbf16>, vector<64x128xbf16>, vector<36x128xf32> -> vector<36x128xf32>
    %c2 = arith.constant 2 : index
    %c0_27 = arith.constant 0 : index
    %c0_28 = arith.constant 0 : index
    %55 = vector.load %arg1[%c2, %c0_27, %c0_28] : memref<3x64x128xbf16, #tpu.memory_space<vmem>>, vector<1x64x128xbf16>
    %56 = vector.shape_cast %55 : vector<1x64x128xbf16> to vector<64x128xbf16>
    %cst_29 = arith.constant dense<0.000000e+00> : vector<36x128xf32>
    %57 = tpu.matmul %48, %56, %cst_29 {dimension_numbers = #tpu.dot_dimension_numbers<[1], [0], [0], [1], [0, 0, 1, 1], [], []>} : vector<36x64xbf16>, vector<64x128xbf16>, vector<36x128xf32> -> vector<36x128xf32>
    %58 = vector.shape_cast %51 : vector<36x128xf32> to vector<2x18x128xf32>
    %59 = vector.shape_cast %54 : vector<36x128xf32> to vector<2x18x128xf32>
    %60 = vector.shape_cast %57 : vector<36x128xf32> to vector<2x18x128xf32>
    %61 = vector.extract_strided_slice %58 {offsets = [0, 0, 0], sizes = [2, 16, 128], strides = [1, 1, 1]} : vector<2x18x128xf32> to vector<2x16x128xf32>
    %62 = vector.extract_strided_slice %59 {offsets = [0, 1, 0], sizes = [2, 16, 128], strides = [1, 1, 1]} : vector<2x18x128xf32> to vector<2x16x128xf32>
    %63 = arith.addf %61, %62 : vector<2x16x128xf32>
    %64 = vector.extract_strided_slice %60 {offsets = [0, 2, 0], sizes = [2, 16, 128], strides = [1, 1, 1]} : vector<2x18x128xf32> to vector<2x16x128xf32>
    %65 = arith.addf %63, %64 : vector<2x16x128xf32>
    %66 = vector.shape_cast %65 : vector<2x16x128xf32> to vector<32x128xf32>
    %cst_30 = arith.constant dense<0.000000e+00> : vector<128xf32>
    %67 = vector.multi_reduction <add>, %66, %cst_30 [0] : vector<32x128xf32> to vector<128xf32>
    %68 = vector.shape_cast %67 : vector<128xf32> to vector<1x128xf32>
    %69 = arith.mulf %66, %66 : vector<32x128xf32>
    %cst_31 = arith.constant dense<0.000000e+00> : vector<128xf32>
    %70 = vector.multi_reduction <add>, %69, %cst_31 [0] : vector<32x128xf32> to vector<128xf32>
    %71 = vector.shape_cast %70 : vector<128xf32> to vector<1x128xf32>
    %cst_32 = arith.constant dense<0.000000e+00> : vector<1x8xf32>
    %72 = tpu.matmul %68, %20, %cst_32 {dimension_numbers = #tpu.dot_dimension_numbers<[1], [0], [0], [1], [0, 0, 1, 1], [], []>} : vector<1x128xf32>, vector<128x8xf32>, vector<1x8xf32> -> vector<1x8xf32>
    %cst_33 = arith.constant dense<0.000000e+00> : vector<1x8xf32>
    %73 = tpu.matmul %71, %20, %cst_33 {dimension_numbers = #tpu.dot_dimension_numbers<[1], [0], [0], [1], [0, 0, 1, 1], [], []>} : vector<1x128xf32>, vector<128x8xf32>, vector<1x8xf32> -> vector<1x8xf32>
    %cst_34 = arith.constant 0.001953125 : f32
    %74 = vector.broadcast %cst_34 : f32 to vector<1x8xf32>
    %75 = arith.mulf %72, %74 : vector<1x8xf32>
    %cst_35 = arith.constant 0.001953125 : f32
    %76 = vector.broadcast %cst_35 : f32 to vector<1x8xf32>
    %77 = arith.mulf %73, %76 : vector<1x8xf32>
    %78 = arith.mulf %75, %75 : vector<1x8xf32>
    %79 = arith.subf %77, %78 : vector<1x8xf32>
    %c0_36 = arith.constant 0 : index
    %c0_37 = arith.constant 0 : index
    %80 = vector.load %arg2[%c0_36, %c0_37] : memref<1x8xf32, #tpu.memory_space<vmem>>, vector<1x8xf32>
    %cst_38 = arith.constant 9.99999974E-6 : f32
    %81 = vector.broadcast %cst_38 : f32 to vector<1x8xf32>
    %82 = arith.addf %79, %81 : vector<1x8xf32>
    %83 = math.rsqrt %82 : vector<1x8xf32>
    %84 = arith.mulf %80, %83 : vector<1x8xf32>
    %c0_39 = arith.constant 0 : index
    %c0_40 = arith.constant 0 : index
    %85 = vector.load %arg3[%c0_39, %c0_40] : memref<1x8xf32, #tpu.memory_space<vmem>>, vector<1x8xf32>
    %86 = arith.mulf %75, %84 : vector<1x8xf32>
    %87 = arith.subf %85, %86 : vector<1x8xf32>
    %cst_41 = arith.constant dense<0.000000e+00> : vector<1x128xf32>
    %88 = tpu.matmul %84, %41, %cst_41 {dimension_numbers = #tpu.dot_dimension_numbers<[1], [0], [0], [1], [0, 0, 1, 1], [], []>} : vector<1x8xf32>, vector<8x128xf32>, vector<1x128xf32> -> vector<1x128xf32>
    %cst_42 = arith.constant dense<0.000000e+00> : vector<1x128xf32>
    %89 = tpu.matmul %87, %41, %cst_42 {dimension_numbers = #tpu.dot_dimension_numbers<[1], [0], [0], [1], [0, 0, 1, 1], [], []>} : vector<1x8xf32>, vector<8x128xf32>, vector<1x128xf32> -> vector<1x128xf32>
    %90 = vector.broadcast %88 : vector<1x128xf32> to vector<32x128xf32>
    %91 = arith.mulf %66, %90 : vector<32x128xf32>
    %92 = vector.broadcast %89 : vector<1x128xf32> to vector<32x128xf32>
    %93 = arith.addf %91, %92 : vector<32x128xf32>
    %cst_43 = arith.constant 0.000000e+00 : f32
    %94 = vector.broadcast %cst_43 : f32 to vector<32x128xf32>
    %95 = arith.maximumf %93, %94 : vector<32x128xf32>
    %cst_44 = arith.constant 0.000000e+00 : f32
    %96 = vector.broadcast %cst_44 : f32 to vector<2x18x128xf32>
    %c0_45 = arith.constant 0 : index
    %c0_46 = arith.constant 0 : index
    %c0_47 = arith.constant 0 : index
    %97 = vector.load %arg9[%c0_45, %c0_46, %c0_47] : memref<2x18x128xf32, #tpu.memory_space<vmem>>, vector<2x18x128xf32>
    tpu.vector_store %arg9[%c0_45, %c0_46, %c0_47], %96 {strides = array<i32>} : memref<2x18x128xf32, #tpu.memory_space<vmem>>, vector<2x18x128xf32>,
    %98 = vector.shape_cast %95 : vector<32x128xf32> to vector<2x16x128xf32>
    %c0_48 = arith.constant 0 : index
    %c1_49 = arith.constant 1 : index
    %c0_50 = arith.constant 0 : index
    %99 = vector.load %arg9[%c0_48, %c1_49, %c0_50] : memref<2x18x128xf32, #tpu.memory_space<vmem>>, vector<2x16x128xf32>
    tpu.vector_store %arg9[%c0_48, %c1_49, %c0_50], %98 {strides = array<i32>} : memref<2x18x128xf32, #tpu.memory_space<vmem>>, vector<2x16x128xf32>,
    %c0_51 = arith.constant 0 : index
    %c0_52 = arith.constant 0 : index
    %c0_53 = arith.constant 0 : index
    %100 = vector.load %arg9[%c0_51, %c0_52, %c0_53] : memref<2x18x128xf32, #tpu.memory_space<vmem>>, vector<2x18x128xf32>
    %101 = vector.shape_cast %100 : vector<2x18x128xf32> to vector<36x128xf32>
    %102 = arith.truncf %101 : vector<36x128xf32> to vector<36x128xbf16>
    %c0_54 = arith.constant 0 : index
    %c0_55 = arith.constant 0 : index
    %c0_56 = arith.constant 0 : index
    %103 = vector.load %arg4[%c0_54, %c0_55, %c0_56] : memref<3x128x128xbf16, #tpu.memory_space<vmem>>, vector<1x128x128xbf16>
    %104 = vector.shape_cast %103 : vector<1x128x128xbf16> to vector<128x128xbf16>
    %cst_57 = arith.constant dense<0.000000e+00> : vector<36x128xf32>
    %105 = tpu.matmul %102, %104, %cst_57 {dimension_numbers = #tpu.dot_dimension_numbers<[1], [0], [0], [1], [0, 0, 1, 1], [], []>} : vector<36x128xbf16>, vector<128x128xbf16>, vector<36x128xf32> -> vector<36x128xf32>
    %c1_58 = arith.constant 1 : index
    %c0_59 = arith.constant 0 : index
    %c0_60 = arith.constant 0 : index
    %106 = vector.load %arg4[%c1_58, %c0_59, %c0_60] : memref<3x128x128xbf16, #tpu.memory_space<vmem>>, vector<1x128x128xbf16>
    %107 = vector.shape_cast %106 : vector<1x128x128xbf16> to vector<128x128xbf16>
    %cst_61 = arith.constant dense<0.000000e+00> : vector<36x128xf32>
    %108 = tpu.matmul %102, %107, %cst_61 {dimension_numbers = #tpu.dot_dimension_numbers<[1], [0], [0], [1], [0, 0, 1, 1], [], []>} : vector<36x128xbf16>, vector<128x128xbf16>, vector<36x128xf32> -> vector<36x128xf32>
    %c2_62 = arith.constant 2 : index
    %c0_63 = arith.constant 0 : index
    %c0_64 = arith.constant 0 : index
    %109 = vector.load %arg4[%c2_62, %c0_63, %c0_64] : memref<3x128x128xbf16, #tpu.memory_space<vmem>>, vector<1x128x128xbf16>
    %110 = vector.shape_cast %109 : vector<1x128x128xbf16> to vector<128x128xbf16>
    %cst_65 = arith.constant dense<0.000000e+00> : vector<36x128xf32>
    %111 = tpu.matmul %102, %110, %cst_65 {dimension_numbers = #tpu.dot_dimension_numbers<[1], [0], [0], [1], [0, 0, 1, 1], [], []>} : vector<36x128xbf16>, vector<128x128xbf16>, vector<36x128xf32> -> vector<36x128xf32>
    %112 = vector.shape_cast %105 : vector<36x128xf32> to vector<2x18x128xf32>
    %113 = vector.shape_cast %108 : vector<36x128xf32> to vector<2x18x128xf32>
    %114 = vector.shape_cast %111 : vector<36x128xf32> to vector<2x18x128xf32>
    %115 = vector.extract_strided_slice %112 {offsets = [0, 0, 0], sizes = [2, 16, 128], strides = [1, 1, 1]} : vector<2x18x128xf32> to vector<2x16x128xf32>
    %116 = vector.extract_strided_slice %113 {offsets = [0, 1, 0], sizes = [2, 16, 128], strides = [1, 1, 1]} : vector<2x18x128xf32> to vector<2x16x128xf32>
    %117 = arith.addf %115, %116 : vector<2x16x128xf32>
    %118 = vector.extract_strided_slice %114 {offsets = [0, 2, 0], sizes = [2, 16, 128], strides = [1, 1, 1]} : vector<2x18x128xf32> to vector<2x16x128xf32>
    %119 = arith.addf %117, %118 : vector<2x16x128xf32>
    %120 = vector.shape_cast %119 : vector<2x16x128xf32> to vector<32x128xf32>
    %cst_66 = arith.constant dense<0.000000e+00> : vector<128xf32>
    %121 = vector.multi_reduction <add>, %120, %cst_66 [0] : vector<32x128xf32> to vector<128xf32>
    %122 = vector.shape_cast %121 : vector<128xf32> to vector<1x128xf32>
    %123 = arith.mulf %120, %120 : vector<32x128xf32>
    %cst_67 = arith.constant dense<0.000000e+00> : vector<128xf32>
    %124 = vector.multi_reduction <add>, %123, %cst_67 [0] : vector<32x128xf32> to vector<128xf32>
    %125 = vector.shape_cast %124 : vector<128xf32> to vector<1x128xf32>
    %cst_68 = arith.constant dense<0.000000e+00> : vector<1x8xf32>
    %126 = tpu.matmul %122, %20, %cst_68 {dimension_numbers = #tpu.dot_dimension_numbers<[1], [0], [0], [1], [0, 0, 1, 1], [], []>} : vector<1x128xf32>, vector<128x8xf32>, vector<1x8xf32> -> vector<1x8xf32>
    %cst_69 = arith.constant dense<0.000000e+00> : vector<1x8xf32>
    %127 = tpu.matmul %125, %20, %cst_69 {dimension_numbers = #tpu.dot_dimension_numbers<[1], [0], [0], [1], [0, 0, 1, 1], [], []>} : vector<1x128xf32>, vector<128x8xf32>, vector<1x8xf32> -> vector<1x8xf32>
    %cst_70 = arith.constant 0.001953125 : f32
    %128 = vector.broadcast %cst_70 : f32 to vector<1x8xf32>
    %129 = arith.mulf %126, %128 : vector<1x8xf32>
    %cst_71 = arith.constant 0.001953125 : f32
    %130 = vector.broadcast %cst_71 : f32 to vector<1x8xf32>
    %131 = arith.mulf %127, %130 : vector<1x8xf32>
    %132 = arith.mulf %129, %129 : vector<1x8xf32>
    %133 = arith.subf %131, %132 : vector<1x8xf32>
    %c0_72 = arith.constant 0 : index
    %c0_73 = arith.constant 0 : index
    %134 = vector.load %arg5[%c0_72, %c0_73] : memref<1x8xf32, #tpu.memory_space<vmem>>, vector<1x8xf32>
    %cst_74 = arith.constant 9.99999974E-6 : f32
    %135 = vector.broadcast %cst_74 : f32 to vector<1x8xf32>
    %136 = arith.addf %133, %135 : vector<1x8xf32>
    %137 = math.rsqrt %136 : vector<1x8xf32>
    %138 = arith.mulf %134, %137 : vector<1x8xf32>
    %c0_75 = arith.constant 0 : index
    %c0_76 = arith.constant 0 : index
    %139 = vector.load %arg6[%c0_75, %c0_76] : memref<1x8xf32, #tpu.memory_space<vmem>>, vector<1x8xf32>
    %140 = arith.mulf %129, %138 : vector<1x8xf32>
    %141 = arith.subf %139, %140 : vector<1x8xf32>
    %cst_77 = arith.constant dense<0.000000e+00> : vector<1x128xf32>
    %142 = tpu.matmul %138, %41, %cst_77 {dimension_numbers = #tpu.dot_dimension_numbers<[1], [0], [0], [1], [0, 0, 1, 1], [], []>} : vector<1x8xf32>, vector<8x128xf32>, vector<1x128xf32> -> vector<1x128xf32>
    %cst_78 = arith.constant dense<0.000000e+00> : vector<1x128xf32>
    %143 = tpu.matmul %141, %41, %cst_78 {dimension_numbers = #tpu.dot_dimension_numbers<[1], [0], [0], [1], [0, 0, 1, 1], [], []>} : vector<1x8xf32>, vector<8x128xf32>, vector<1x128xf32> -> vector<1x128xf32>
    %144 = vector.broadcast %142 : vector<1x128xf32> to vector<32x128xf32>
    %145 = arith.mulf %120, %144 : vector<32x128xf32>
    %146 = vector.broadcast %143 : vector<1x128xf32> to vector<32x128xf32>
    %147 = arith.addf %145, %146 : vector<32x128xf32>
    %cst_79 = arith.constant 0.000000e+00 : f32
    %148 = vector.broadcast %cst_79 : f32 to vector<32x128xf32>
    %149 = arith.maximumf %147, %148 : vector<32x128xf32>
    %150 = vector.shape_cast %149 : vector<32x128xf32> to vector<2x16x128xf32>
    %c0_80 = arith.constant 0 : index
    %c0_81 = arith.constant 0 : index
    %c0_82 = arith.constant 0 : index
    %151 = vector.load %arg7[%c0_80, %c0_81, %c0_82] : memref<2x16x128xf32, #tpu.memory_space<vmem>>, vector<2x16x128xf32>
    tpu.vector_store %arg7[%c0_80, %c0_81, %c0_82], %150 {strides = array<i32>} : memref<2x16x128xf32, #tpu.memory_space<vmem>>, vector<2x16x128xf32>,
    return
  }
}

</mosaic_0001>

<llo_original>
// kernel: unet_block_forward.1
$region0: #{unet_block_forward.1}
  #allocation0 [shape = 'u32[]', space=smem, size = 0x4, offset = 0x4, fixed_abs, tag = 'smem constant byte address 0x4 - core index']
  #allocation1 [shape = 'u32[72,128]{1,0:T(1,128)}', space=vmem, size = 0x9000, scoped, tag = 'internal scratch']
  #allocation2 [shape = 'f32[2,18,64]{2,1,0:T(8,128)}', space=vmem, size = 0x6000, scoped, tag = 'scratch operand']
  #allocation3 [shape = 'f32[2,18,128]{2,1,0:T(8,128)}', space=vmem, size = 0x6000, scoped, tag = 'scratch operand']
  %s0 = inlined_call_operand.vmem [shape: f32[2,16,64], index: 0, kind: input, shape index: {}]
  %s1 = inlined_call_operand.vmem [shape: bf16[3,64,128], index: 1, kind: input, shape index: {}]
  %s2 = inlined_call_operand.vmem [shape: f32[1,8], index: 2, kind: input, shape index: {}]
  %s3 = inlined_call_operand.vmem [shape: f32[1,8], index: 3, kind: input, shape index: {}]
  %s4 = inlined_call_operand.vmem [shape: bf16[3,128,128], index: 4, kind: input, shape index: {}]
  %s5 = inlined_call_operand.vmem [shape: f32[1,8], index: 5, kind: input, shape index: {}]
  %s6 = inlined_call_operand.vmem [shape: f32[1,8], index: 6, kind: input, shape index: {}]
  %s7 = inlined_call_operand.vmem [shape: f32[2,16,128], index: 7, kind: output, shape index: {}]
  %s8 = sld [smem:[#allocation0]]
  $region38: #{unet_block_forward.1} parent=0
    _
  %s10 = ssub.s32 1, %s8
  %s11 = scalar_select 0, %s10, %s8
  // Predicated region
  $region2: #{unet_block_forward.1} parent=0 // pred_check
    _
  $region3: #{unet_block_forward.1} parent=0 // pred_check_branch
    %13 = sbr.rel (0) target = $region5
  $region4: #{unet_block_forward.1} parent=0 // pred_region
    _
  $region5: #{unet_block_forward.1} parent=0 // pred_fallthru
    _
  // Predicated region
  $region6: #{unet_block_forward.1} parent=0 // pred_check
    _
  $region7: #{unet_block_forward.1} parent=0 // pred_check_branch
    %15 = sbr.rel (0) target = $region9
  $region8: #{unet_block_forward.1} parent=0 // pred_region
    _
  $region9: #{unet_block_forward.1} parent=0 // pred_fallthru
    _
  // Predicated region
  $region10: #{unet_block_forward.1} parent=0 // pred_check
    _
  $region11: #{unet_block_forward.1} parent=0 // pred_check_branch
    %17 = sbr.rel (0) target = $region13
  $region12: #{unet_block_forward.1} parent=0 // pred_region
    _
  $region13: #{unet_block_forward.1} parent=0 // pred_fallthru
    _
  // Predicated region
  $region14: #{unet_block_forward.1} parent=0 // pred_check
    _
  $region15: #{unet_block_forward.1} parent=0 // pred_check_branch
    %19 = sbr.rel (0) target = $region17
  $region16: #{unet_block_forward.1} parent=0 // pred_region
    _
  $region17: #{unet_block_forward.1} parent=0 // pred_fallthru
    _
  // Predicated region
  $region18: #{unet_block_forward.1} parent=0 // pred_check
    _
  $region19: #{unet_block_forward.1} parent=0 // pred_check_branch
    %21 = sbr.rel (0) target = $region21
  $region20: #{unet_block_forward.1} parent=0 // pred_region
    _
  $region21: #{unet_block_forward.1} parent=0 // pred_fallthru
    _
  // Predicated region
  $region22: #{unet_block_forward.1} parent=0 // pred_check
    _
  $region23: #{unet_block_forward.1} parent=0 // pred_check_branch
    %23 = sbr.rel (0) target = $region25
  $region24: #{unet_block_forward.1} parent=0 // pred_region
    _
  $region25: #{unet_block_forward.1} parent=0 // pred_fallthru
    _
  // Predicated region
  $region26: #{unet_block_forward.1} parent=0 // pred_check
    _
  $region27: #{unet_block_forward.1} parent=0 // pred_check_branch
    %25 = sbr.rel (0) target = $region29
  $region28: #{unet_block_forward.1} parent=0 // pred_region
    _
  $region29: #{unet_block_forward.1} parent=0 // pred_fallthru
    _
  %v27 = vlaneseq
  %v28 = vshrl.u32 %v27, 7
  %v29 = vadd.s32 %v28, 8
  %v30 = vadd.s32 %v28, 16
  %v31 = vadd.s32 %v28, 24
  %v32 = vadd.s32 %v28, 32
  %v33 = vadd.s32 %v28, 40
  %v34 = vadd.s32 %v28, 48
  %v35 = vadd.s32 %v28, 56
  %v36 = vadd.s32 %v28, 64
  %v37 = vadd.s32 %v28, 72
  %v38 = vadd.s32 %v28, 80
  %v39 = vadd.s32 %v28, 88
  %v40 = vadd.s32 %v28, 96
  %v41 = vadd.s32 %v28, 104
  %v42 = vadd.s32 %v28, 112
  %v43 = vadd.s32 %v28, 120
  %vm44 = vcmp.lt.s32.totalorder %v28, 0
  %v45 = vsub.s32 0, %v28
  %v46 = vsel %vm44, %v45, %v28
  %v47 = vshrl.u32 %v46, 3
  %v48 = vand.u32 %v46, 7
  %v49 = vsub.s32 0, %v48
  %v50 = vsel %vm44, %v49, %v48
  %vm51 = vcmp.lt.s32.totalorder %v29, 0
  %v52 = vsub.s32 0, %v29
  %v53 = vsel %vm51, %v52, %v29
  %v54 = vshrl.u32 %v53, 3
  %v55 = vand.u32 %v53, 7
  %v56 = vsub.s32 0, %v55
  %v57 = vsel %vm51, %v56, %v55
  %vm58 = vcmp.lt.s32.totalorder %v30, 0
  %v59 = vsub.s32 0, %v30
  %v60 = vsel %vm58, %v59, %v30
  %v61 = vshrl.u32 %v60, 3
  %v62 = vand.u32 %v60, 7
  %v63 = vsub.s32 0, %v62
  %v64 = vsel %vm58, %v63, %v62
  %vm65 = vcmp.lt.s32.totalorder %v31, 0
  %v66 = vsub.s32 0, %v31
  %v67 = vsel %vm65, %v66, %v31
  %v68 = vshrl.u32 %v67, 3
  %v69 = vand.u32 %v67, 7
  %v70 = vsub.s32 0, %v69
  %v71 = vsel %vm65, %v70, %v69
  %vm72 = vcmp.lt.s32.totalorder %v32, 0
  %v73 = vsub.s32 0, %v32
  %v74 = vsel %vm72, %v73, %v32
  %v75 = vshrl.u32 %v74, 3
  %v76 = vand.u32 %v74, 7
  %v77 = vsub.s32 0, %v76
  %v78 = vsel %vm72, %v77, %v76
  %vm79 = vcmp.lt.s32.totalorder %v33, 0
  %v80 = vsub.s32 0, %v33
  %v81 = vsel %vm79, %v80, %v33
  %v82 = vshrl.u32 %v81, 3
  %v83 = vand.u32 %v81, 7
  %v84 = vsub.s32 0, %v83
  %v85 = vsel %vm79, %v84, %v83
  %vm86 = vcmp.lt.s32.totalorder %v34, 0
  %v87 = vsub.s32 0, %v34
  %v88 = vsel %vm86, %v87, %v34
  %v89 = vshrl.u32 %v88, 3
  %v90 = vand.u32 %v88, 7
  %v91 = vsub.s32 0, %v90
  %v92 = vsel %vm86, %v91, %v90
  %vm93 = vcmp.lt.s32.totalorder %v35, 0
  %v94 = vsub.s32 0, %v35
  %v95 = vsel %vm93, %v94, %v35
  %v96 = vshrl.u32 %v95, 3
  %v97 = vand.u32 %v95, 7
  %v98 = vsub.s32 0, %v97
  %v99 = vsel %vm93, %v98, %v97
  %vm100 = vcmp.lt.s32.totalorder %v36, 0
  %v101 = vsub.s32 0, %v36
  %v102 = vsel %vm100, %v101, %v36
  %v103 = vshrl.u32 %v102, 3
  %v104 = vand.u32 %v102, 7
  %v105 = vsub.s32 0, %v104
  %v106 = vsel %vm100, %v105, %v104
  %vm107 = vcmp.lt.s32.totalorder %v37, 0
  %v108 = vsub.s32 0, %v37
  %v109 = vsel %vm107, %v108, %v37
  %v110 = vshrl.u32 %v109, 3
  %v111 = vand.u32 %v109, 7
  %v112 = vsub.s32 0, %v111
  %v113 = vsel %vm107, %v112, %v111
  %vm114 = vcmp.lt.s32.totalorder %v38, 0
  %v115 = vsub.s32 0, %v38
  %v116 = vsel %vm114, %v115, %v38
  %v117 = vshrl.u32 %v116, 3
  %v118 = vand.u32 %v116, 7
  %v119 = vsub.s32 0, %v118
  %v120 = vsel %vm114, %v119, %v118
  %vm121 = vcmp.lt.s32.totalorder %v39, 0
  %v122 = vsub.s32 0, %v39
  %v123 = vsel %vm121, %v122, %v39
  %v124 = vshrl.u32 %v123, 3
  %v125 = vand.u32 %v123, 7
  %v126 = vsub.s32 0, %v125
  %v127 = vsel %vm121, %v126, %v125
  %vm128 = vcmp.lt.s32.totalorder %v40, 0
  %v129 = vsub.s32 0, %v40
  %v130 = vsel %vm128, %v129, %v40
  %v131 = vshrl.u32 %v130, 3
  %v132 = vand.u32 %v130, 7
  %v133 = vsub.s32 0, %v132
  %v134 = vsel %vm128, %v133, %v132
  %vm135 = vcmp.lt.s32.totalorder %v41, 0
  %v136 = vsub.s32 0, %v41
  %v137 = vsel %vm135, %v136, %v41
  %v138 = vshrl.u32 %v137, 3
  %v139 = vand.u32 %v137, 7
  %v140 = vsub.s32 0, %v139
  %v141 = vsel %vm135, %v140, %v139
  %vm142 = vcmp.lt.s32.totalorder %v42, 0
  %v143 = vsub.s32 0, %v42
  %v144 = vsel %vm142, %v143, %v42
  %v145 = vshrl.u32 %v144, 3
  %v146 = vand.u32 %v144, 7
  %v147 = vsub.s32 0, %v146
  %v148 = vsel %vm142, %v147, %v146
  %vm149 = vcmp.lt.s32.totalorder %v43, 0
  %v150 = vsub.s32 0, %v43
  %v151 = vsel %vm149, %v150, %v43
  %v152 = vshrl.u32 %v151, 3
  %v153 = vand.u32 %v151, 7
  %v154 = vsub.s32 0, %v153
  %v155 = vsel %vm149, %v154, %v153
  %vm156 = vcmp.ne.s32.totalorder %v50, 0
  %vm157 = vcmp.ne.s32.totalorder %v57, 0
  %vm158 = vcmp.ne.s32.totalorder %v64, 0
  %vm159 = vcmp.ne.s32.totalorder %v71, 0
  %vm160 = vcmp.ne.s32.totalorder %v78, 0
  %vm161 = vcmp.ne.s32.totalorder %v85, 0
  %vm162 = vcmp.ne.s32.totalorder %v92, 0
  %vm163 = vcmp.ne.s32.totalorder %v99, 0
  %vm164 = vcmp.ne.s32.totalorder %v106, 0
  %vm165 = vcmp.ne.s32.totalorder %v113, 0
  %vm166 = vcmp.ne.s32.totalorder %v120, 0
  %vm167 = vcmp.ne.s32.totalorder %v127, 0
  %vm168 = vcmp.ne.s32.totalorder %v134, 0
  %vm169 = vcmp.ne.s32.totalorder %v141, 0
  %vm170 = vcmp.ne.s32.totalorder %v148, 0
  %vm171 = vcmp.ne.s32.totalorder %v155, 0
  %vm172 = vcmp.lt.s32.totalorder %v50, 0
  %vm173 = vcmp.lt.s32.totalorder %v57, 0
  %vm174 = vcmp.lt.s32.totalorder %v64, 0
  %vm175 = vcmp.lt.s32.totalorder %v71, 0
  %vm176 = vcmp.lt.s32.totalorder %v78, 0
  %vm177 = vcmp.lt.s32.totalorder %v85, 0
  %vm178 = vcmp.lt.s32.totalorder %v92, 0
  %vm179 = vcmp.lt.s32.totalorder %v99, 0
  %vm180 = vcmp.lt.s32.totalorder %v106, 0
  %vm181 = vcmp.lt.s32.totalorder %v113, 0
  %vm182 = vcmp.lt.s32.totalorder %v120, 0
  %vm183 = vcmp.lt.s32.totalorder %v127, 0
  %vm184 = vcmp.lt.s32.totalorder %v134, 0
  %vm185 = vcmp.lt.s32.totalorder %v141, 0
  %vm186 = vcmp.lt.s32.totalorder %v148, 0
  %vm187 = vcmp.lt.s32.totalorder %v155, 0
  %vm188 = vmand %vm172, %vm156
  %vm189 = vmand %vm173, %vm157
  %vm190 = vmand %vm174, %vm158
  %vm191 = vmand %vm175, %vm159
  %vm192 = vmand %vm176, %vm160
  %vm193 = vmand %vm177, %vm161
  %vm194 = vmand %vm178, %vm162
  %vm195 = vmand %vm179, %vm163
  %vm196 = vmand %vm180, %vm164
  %vm197 = vmand %vm181, %vm165
  %vm198 = vmand %vm182, %vm166
  %vm199 = vmand %vm183, %vm167
  %vm200 = vmand %vm184, %vm168
  %vm201 = vmand %vm185, %vm169
  %vm202 = vmand %vm186, %vm170
  %vm203 = vmand %vm187, %vm171
  %v204 = vadd.s32 %v50, 8
  %v205 = vadd.s32 %v57, 8
  %v206 = vadd.s32 %v64, 8
  %v207 = vadd.s32 %v71, 8
  %v208 = vadd.s32 %v78, 8
  %v209 = vadd.s32 %v85, 8
  %v210 = vadd.s32 %v92, 8
  %v211 = vadd.s32 %v99, 8
  %v212 = vadd.s32 %v106, 8
  %v213 = vadd.s32 %v113, 8
  %v214 = vadd.s32 %v120, 8
  %v215 = vadd.s32 %v127, 8
  %v216 = vadd.s32 %v134, 8
  %v217 = vadd.s32 %v141, 8
  %v218 = vadd.s32 %v148, 8
  %v219 = vadd.s32 %v155, 8
  %v220 = vsel %vm188, %v204, %v50
  %v221 = vsel %vm189, %v205, %v57
  %v222 = vsel %vm190, %v206, %v64
  %v223 = vsel %vm191, %v207, %v71
  %v224 = vsel %vm192, %v208, %v78
  %v225 = vsel %vm193, %v209, %v85
  %v226 = vsel %vm194, %v210, %v92
  %v227 = vsel %vm195, %v211, %v99
  %v228 = vsel %vm196, %v212, %v106
  %v229 = vsel %vm197, %v213, %v113
  %v230 = vsel %vm198, %v214, %v120
  %v231 = vsel %vm199, %v215, %v127
  %v232 = vsel %vm200, %v216, %v134
  %v233 = vsel %vm201, %v217, %v141
  %v234 = vsel %vm202, %v218, %v148
  %v235 = vsel %vm203, %v219, %v155
  %v236 = vlaneseq
  %v237 = vand.u32 %v236, 127
  %vm238 = vcmp.eq.s32.totalorder %v220, %v237
  %vm239 = vcmp.eq.s32.totalorder %v221, %v237
  %vm240 = vcmp.eq.s32.totalorder %v222, %v237
  %vm241 = vcmp.eq.s32.totalorder %v223, %v237
  %vm242 = vcmp.eq.s32.totalorder %v224, %v237
  %vm243 = vcmp.eq.s32.totalorder %v225, %v237
  %vm244 = vcmp.eq.s32.totalorder %v226, %v237
  %vm245 = vcmp.eq.s32.totalorder %v227, %v237
  %vm246 = vcmp.eq.s32.totalorder %v228, %v237
  %vm247 = vcmp.eq.s32.totalorder %v229, %v237
  %vm248 = vcmp.eq.s32.totalorder %v230, %v237
  %vm249 = vcmp.eq.s32.totalorder %v231, %v237
  %vm250 = vcmp.eq.s32.totalorder %v232, %v237
  %vm251 = vcmp.eq.s32.totalorder %v233, %v237
  %vm252 = vcmp.eq.s32.totalorder %v234, %v237
  %vm253 = vcmp.eq.s32.totalorder %v235, %v237
  %v254 = vsel %vm238, 1, 0
  %v255 = vsel %vm239, 1, 0
  %v256 = vsel %vm240, 1, 0
  %v257 = vsel %vm241, 1, 0
  %v258 = vsel %vm242, 1, 0
  %v259 = vsel %vm243, 1, 0
  %v260 = vsel %vm244, 1, 0
  %v261 = vsel %vm245, 1, 0
  %v262 = vsel %vm246, 1, 0
  %v263 = vsel %vm247, 1, 0
  %v264 = vsel %vm248, 1, 0
  %v265 = vsel %vm249, 1, 0
  %v266 = vsel %vm250, 1, 0
  %v267 = vsel %vm251, 1, 0
  %v268 = vsel %vm252, 1, 0
  %v269 = vsel %vm253, 1, 0
  %v270 = vcvt.s32.f32 %v254
  %v271 = vcvt.s32.f32 %v255
  %v272 = vcvt.s32.f32 %v256
  %v273 = vcvt.s32.f32 %v257
  %v274 = vcvt.s32.f32 %v258
  %v275 = vcvt.s32.f32 %v259
  %v276 = vcvt.s32.f32 %v260
  %v277 = vcvt.s32.f32 %v261
  %v278 = vcvt.s32.f32 %v262
  %v279 = vcvt.s32.f32 %v263
  %v280 = vcvt.s32.f32 %v264
  %v281 = vcvt.s32.f32 %v265
  %v282 = vcvt.s32.f32 %v266
  %v283 = vcvt.s32.f32 %v267
  %v284 = vcvt.s32.f32 %v268
  %v285 = vcvt.s32.f32 %v269
  %vm286 = vcmp.lt.s32.totalorder %v237, 0
  %v287 = vsub.s32 0, %v237
  %v288 = vsel %vm286, %v287, %v237
  %v289 = vshrl.u32 %v288, 3
  %v290 = vand.u32 %v288, 7
  %v291 = vsub.s32 0, %v290
  %v292 = vsel %vm286, %v291, %v290
  %vm293 = vcmp.ne.s32.totalorder %v292, 0
  %vm294 = vcmp.lt.s32.totalorder %v292, 0
  %vm295 = vmand %vm294, %vm293
  %v296 = vadd.s32 %v292, 8
  %v297 = vsel %vm295, %v296, %v292
  %vm298 = vcmp.eq.s32.totalorder %v28, %v297
  %v299 = vsel %vm298, 1, 0
  %v300 = vcvt.s32.f32 %v299
  %vm301 = vcmask 523264
  %302 = vst.msk [vmem:[#allocation2] sm:$0xff] %vm301, 0.0
  %303 = vst.msk [vmem:[#allocation2 + $0x8] sm:$0xff] %vm301, 0.0
  %vm304 = vcmask 517120
  %305 = vst.msk [vmem:[#allocation2 + $0x10] sm:$0x3] %vm304, 0.0
  %306 = vst.msk [vmem:[#allocation2 + $0x18] sm:$0xff] %vm301, 0.0
  %307 = vst.msk [vmem:[#allocation2 + $0x20] sm:$0xff] %vm301, 0.0
  %308 = vst.msk [vmem:[#allocation2 + $0x28] sm:$0x3] %vm304, 0.0
  %v309 = vld [vmem:[%s0] sm:$0xff]
  %v310 = vld [vmem:[%s0 + $0x8] sm:$0xff]
  %v311 = vld [vmem:[%s0 + $0x10] sm:$0xff]
  %v312 = vld [vmem:[%s0 + $0x18] sm:$0xff]
  %313 = vst.msk [vmem:[#allocation2 + $0x1] sm:$0xff] %vm301, %v309
  %314 = vst.msk [vmem:[#allocation2 + $0x9] sm:$0xff] %vm301, %v310
  %315 = vst.msk [vmem:[#allocation2 + $0x19] sm:$0xff] %vm301, %v311
  %316 = vst.msk [vmem:[#allocation2 + $0x21] sm:$0xff] %vm301, %v312
  %v317 = vld [vmem:[#allocation2] sm:$0xff]
  %v318 = vld [vmem:[#allocation2 + $0x8] sm:$0xff]
  %v319 = vld [vmem:[#allocation2 + $0x10] sm:$0x3]
  %v320 = vld [vmem:[#allocation2 + $0x18] sm:$0xff]
  %v321 = vld [vmem:[#allocation2 + $0x20] sm:$0xff]
  %v322 = vld [vmem:[#allocation2 + $0x28] sm:$0x3]
  %v329 = vrot.slane %v317, 2
  %v330 = vrot.slane %v317, 4
  %v331 = vrot.slane %v317, 6
  %v332 = vrot.slane %v318, 2
  %v333 = vrot.slane %v318, 4
  %v334 = vrot.slane %v318, 6
  %v335 = vrot.slane %v320, 2
  %v336 = vrot.slane %v320, 4
  %v337 = vrot.slane %v320, 6
  %v338 = vrot.slane %v321, 2
  %v339 = vrot.slane %v321, 4
  %v340 = vrot.slane %v321, 6
  %341 = vst [vmem:[#allocation1] ss:$4 sm:$0xff] %v317
  %s342 = scalar_lea.vmem [#allocation1], 1
  %343 = vst [vmem:[%s342] ss:$4 sm:$0xff] %v329
  %s344 = scalar_lea.vmem [#allocation1], 2
  %345 = vst [vmem:[%s344] ss:$4 sm:$0xff] %v330
  %s346 = scalar_lea.vmem [#allocation1], 3
  %347 = vst [vmem:[%s346] ss:$4 sm:$0xff] %v331
  %s348 = scalar_lea.vmem [#allocation1], 32
  %349 = vst [vmem:[%s348] ss:$4 sm:$0xff] %v318
  %s350 = scalar_lea.vmem [#allocation1], 33
  %351 = vst [vmem:[%s350] ss:$4 sm:$0xff] %v332
  %s352 = scalar_lea.vmem [#allocation1], 34
  %353 = vst [vmem:[%s352] ss:$4 sm:$0xff] %v333
  %s354 = scalar_lea.vmem [#allocation1], 35
  %355 = vst [vmem:[%s354] ss:$4 sm:$0xff] %v334
  %v356 = vld.sshfl [vmem:[#allocation1] sm:$0xff pattern:$0x73625140]
  %v357 = vld.sshfl [vmem:[#allocation1 + $0x20] sm:$0xff pattern:$0x73625140]
  %358 = vst [vmem:[#allocation1] ss:$4 sm:$0xff] %v319
  %359 = vst [vmem:[%s342] ss:$4 sm:$0xff] %v320
  %360 = vst [vmem:[%s344] ss:$4 sm:$0xff] %v335
  %361 = vst [vmem:[%s346] ss:$4 sm:$0xff] %v336
  %362 = vst [vmem:[%s348] ss:$4 sm:$0xff] %v337
  %363 = vst [vmem:[%s350] ss:$4 sm:$0xff] %v321
  %364 = vst [vmem:[%s352] ss:$4 sm:$0xff] %v338
  %365 = vst [vmem:[%s354] ss:$4 sm:$0xff] %v339
  %v366 = vld.sshfl [vmem:[#allocation1] sm:$0xff pattern:$0x73625140]
  %v367 = vld.sshfl [vmem:[#allocation1 + $0x20] sm:$0xff pattern:$0x73625140]
  %368 = vst [vmem:[#allocation1] ss:$4 sm:$0xff] %v340
  %369 = vst [vmem:[%s342] ss:$4 sm:$0xff] %v322
  %v370 = vld.sshfl [vmem:[#allocation1] sm:$0xff pattern:$0x73625140]
  %v376 = vpack.c.bf16 %v357, %v356
  %v377 = vpack.c.bf16 %v367, %v366
  %v378 = vpack.c.bf16 %v370, %v370
  %v379 = vld [vmem:[%s1] sm:$0xf]
  %v380 = vld [vmem:[%s1 + $0x4] sm:$0xf]
  %v381 = vld [vmem:[%s1 + $0x8] sm:$0xf]
  %v382 = vld [vmem:[%s1 + $0xc] sm:$0xf]
  %v383 = vld [vmem:[%s1 + $0x10] sm:$0xf]
  %v384 = vld [vmem:[%s1 + $0x14] sm:$0xf]
  %v385 = vld [vmem:[%s1 + $0x18] sm:$0xf]
  %v386 = vld [vmem:[%s1 + $0x1c] sm:$0xf]
  %v395 = vunpack.c.l.b16 %v379
  %v396 = vunpack.c.l.b16 %v380
  %v397 = vunpack.c.l.b16 %v381
  %v398 = vunpack.c.l.b16 %v382
  %v399 = vunpack.c.l.b16 %v383
  %v400 = vunpack.c.l.b16 %v384
  %v401 = vunpack.c.l.b16 %v385
  %v402 = vunpack.c.l.b16 %v386
  %v403 = vpack.c.b16 %v396, %v395
  %v404 = vpack.c.b16 %v398, %v397
  %v405 = vpack.c.b16 %v400, %v399
  %v406 = vpack.c.b16 %v402, %v401
  %v412 = vsel %vm301, %v376, 0
  %v415 = vsel %vm301, %v377, 0
  %v418 = vsel %vm301, %v378, 0
  %420 = vmatpush.bf16.msra.mxu0 0
  %421 = vmatpush.bf16.msra.mxu0 0
  %422 = vmatpush.bf16.msra.mxu0 0
  %423 = vmatpush.bf16.msra.mxu0 0
  %424 = vmatpush.bf16.msra.mxu0 %v406
  %425 = vmatpush.bf16.msra.mxu0 %v405
  %426 = vmatpush.bf16.msra.mxu0 %v404
  %427 = vmatpush.bf16.msra.mxu0 %v403
  %428 = vmatmul.bf16.gmra.mxu0 %v412
  %v429 = vpop.f32.mrf.mxu0
  %v430 = vadd.f32 0.0, %v429
  %v431 = vpop.f32.mrf.mxu0
  %v432 = vadd.f32 0.0, %v431
  %433 = vmatmul.bf16.gmra.mxu0 %v415
  %v434 = vpop.f32.mrf.mxu0
  %v435 = vadd.f32 0.0, %v434
  %v436 = vpop.f32.mrf.mxu0
  %v437 = vadd.f32 0.0, %v436
  %438 = vmatmul.bf16.gmra.mxu0 %v418
  %v439 = vpop.f32.mrf.mxu0
  %v440 = vadd.f32 0.0, %v439
  %v441 = vpop.f32.mrf.mxu0
  %442 = vdwg.mxu0
  %s443 = scalar_lea.vmem %s1, 32
  %v444 = vld [vmem:[%s443] sm:$0xf]
  %v445 = vld [vmem:[%s443 + $0x4] sm:$0xf]
  %v446 = vld [vmem:[%s443 + $0x8] sm:$0xf]
  %v447 = vld [vmem:[%s443 + $0xc] sm:$0xf]
  %v448 = vld [vmem:[%s443 + $0x10] sm:$0xf]
  %v449 = vld [vmem:[%s443 + $0x14] sm:$0xf]
  %v450 = vld [vmem:[%s443 + $0x18] sm:$0xf]
  %v451 = vld [vmem:[%s443 + $0x1c] sm:$0xf]
  %v460 = vunpack.c.l.b16 %v444
  %v461 = vunpack.c.l.b16 %v445
  %v462 = vunpack.c.l.b16 %v446
  %v463 = vunpack.c.l.b16 %v447
  %v464 = vunpack.c.l.b16 %v448
  %v465 = vunpack.c.l.b16 %v449
  %v466 = vunpack.c.l.b16 %v450
  %v467 = vunpack.c.l.b16 %v451
  %v468 = vpack.c.b16 %v461, %v460
  %v469 = vpack.c.b16 %v463, %v462
  %v470 = vpack.c.b16 %v465, %v464
  %v471 = vpack.c.b16 %v467, %v466
  %476 = vmatpush.bf16.msra.mxu0 0
  %477 = vmatpush.bf16.msra.mxu0 0
  %478 = vmatpush.bf16.msra.mxu0 0
  %479 = vmatpush.bf16.msra.mxu0 0
  %480 = vmatpush.bf16.msra.mxu0 %v471
  %481 = vmatpush.bf16.msra.mxu0 %v470
  %482 = vmatpush.bf16.msra.mxu0 %v469
  %483 = vmatpush.bf16.msra.mxu0 %v468
  %484 = vmatmul.bf16.gmra.mxu0 %v412
  %v485 = vpop.f32.mrf.mxu0
  %v486 = vadd.f32 0.0, %v485
  %v487 = vpop.f32.mrf.mxu0
  %v488 = vadd.f32 0.0, %v487
  %489 = vmatmul.bf16.gmra.mxu0 %v415
  %v490 = vpop.f32.mrf.mxu0
  %v491 = vadd.f32 0.0, %v490
  %v492 = vpop.f32.mrf.mxu0
  %v493 = vadd.f32 0.0, %v492
  %494 = vmatmul.bf16.gmra.mxu0 %v418
  %v495 = vpop.f32.mrf.mxu0
  %v496 = vadd.f32 0.0, %v495
  %v497 = vpop.f32.mrf.mxu0
  %498 = vdwg.mxu0
  %s499 = scalar_lea.vmem %s1, 64
  %v500 = vld [vmem:[%s499] sm:$0xf]
  %v501 = vld [vmem:[%s499 + $0x4] sm:$0xf]
  %v502 = vld [vmem:[%s499 + $0x8] sm:$0xf]
  %v503 = vld [vmem:[%s499 + $0xc] sm:$0xf]
  %v504 = vld [vmem:[%s499 + $0x10] sm:$0xf]
  %v505 = vld [vmem:[%s499 + $0x14] sm:$0xf]
  %v506 = vld [vmem:[%s499 + $0x18] sm:$0xf]
  %v507 = vld [vmem:[%s499 + $0x1c] sm:$0xf]
  %v516 = vunpack.c.l.b16 %v500
  %v517 = vunpack.c.l.b16 %v501
  %v518 = vunpack.c.l.b16 %v502
  %v519 = vunpack.c.l.b16 %v503
  %v520 = vunpack.c.l.b16 %v504
  %v521 = vunpack.c.l.b16 %v505
  %v522 = vunpack.c.l.b16 %v506
  %v523 = vunpack.c.l.b16 %v507
  %v524 = vpack.c.b16 %v517, %v516
  %v525 = vpack.c.b16 %v519, %v518
  %v526 = vpack.c.b16 %v521, %v520
  %v527 = vpack.c.b16 %v523, %v522
  %532 = vmatpush.bf16.msra.mxu0 0
  %533 = vmatpush.bf16.msra.mxu0 0
  %534 = vmatpush.bf16.msra.mxu0 0
  %535 = vmatpush.bf16.msra.mxu0 0
  %536 = vmatpush.bf16.msra.mxu0 %v527
  %537 = vmatpush.bf16.msra.mxu0 %v526
  %538 = vmatpush.bf16.msra.mxu0 %v525
  %539 = vmatpush.bf16.msra.mxu0 %v524
  %540 = vmatmul.bf16.gmra.mxu0 %v412
  %v541 = vpop.f32.mrf.mxu0
  %v542 = vadd.f32 0.0, %v541
  %v543 = vpop.f32.mrf.mxu0
  %v544 = vadd.f32 0.0, %v543
  %545 = vmatmul.bf16.gmra.mxu0 %v415
  %v546 = vpop.f32.mrf.mxu0
  %v547 = vadd.f32 0.0, %v546
  %v548 = vpop.f32.mrf.mxu0
  %v549 = vadd.f32 0.0, %v548
  %550 = vmatmul.bf16.gmra.mxu0 %v418
  %v551 = vpop.f32.mrf.mxu0
  %v552 = vadd.f32 0.0, %v551
  %v553 = vpop.f32.mrf.mxu0
  %554 = vdwg.mxu0
  %v559 = vrot.slane %v430, 2
  %v560 = vrot.slane %v430, 4
  %v561 = vrot.slane %v430, 6
  %v562 = vrot.slane %v432, 2
  %v563 = vrot.slane %v432, 4
  %v564 = vrot.slane %v432, 6
  %v565 = vrot.slane %v435, 2
  %v566 = vrot.slane %v435, 4
  %v567 = vrot.slane %v435, 6
  %v568 = vrot.slane %v437, 2
  %v569 = vrot.slane %v437, 4
  %v570 = vrot.slane %v437, 6
  %v588 = vrot.slane %v486, 2
  %v589 = vrot.slane %v486, 4
  %v590 = vrot.slane %v486, 6
  %v591 = vrot.slane %v488, 2
  %v592 = vrot.slane %v488, 4
  %v593 = vrot.slane %v488, 6
  %v594 = vrot.slane %v491, 2
  %v595 = vrot.slane %v491, 4
  %v596 = vrot.slane %v491, 6
  %v597 = vrot.slane %v493, 2
  %v598 = vrot.slane %v493, 4
  %v599 = vrot.slane %v493, 6
  %v600 = vrot.slane %v496, 2
  %v606 = vrot.slane %v542, 2
  %v607 = vrot.slane %v542, 4
  %v608 = vrot.slane %v542, 6
  %v609 = vrot.slane %v544, 2
  %v610 = vrot.slane %v544, 4
  %v611 = vrot.slane %v544, 6
  %v612 = vrot.slane %v547, 4
  %v613 = vrot.slane %v547, 6
  %v614 = vrot.slane %v549, 2
  %v615 = vrot.slane %v549, 4
  %v616 = vrot.slane %v549, 6
  %v617 = vrot.slane %v552, 2
  %vm630 = vcmask 1040384
  %vm631 = vcmask 1042434
  %vm632 = vmor %vm630, %vm631
  %vm633 = vcmask 1044484
  %vm634 = vmor %vm632, %vm633
  %vm635 = vcmask 1046534
  %vm636 = vmor %vm634, %vm635
  %v637 = vrot.slane %v486, 7
  %v638 = vrot.slane %v637, 2
  %v639 = vrot.slane %v588, 7
  %v640 = vsel %vm636, %v638, %v639
  %v641 = vrot.slane %v639, 2
  %v642 = vrot.slane %v589, 7
  %v643 = vsel %vm636, %v641, %v642
  %v644 = vrot.slane %v642, 2
  %v645 = vrot.slane %v590, 7
  %v646 = vsel %vm636, %v644, %v645
  %v647 = vrot.slane %v645, 2
  %v648 = vrot.slane %v488, 7
  %v649 = vsel %vm636, %v647, %v648
  %v650 = vrot.slane %v648, 2
  %v651 = vrot.slane %v591, 7
  %v652 = vsel %vm636, %v650, %v651
  %v653 = vrot.slane %v651, 2
  %v654 = vrot.slane %v592, 7
  %v655 = vsel %vm636, %v653, %v654
  %v656 = vrot.slane %v654, 2
  %v657 = vrot.slane %v593, 7
  %v658 = vsel %vm636, %v656, %v657
  %v659 = vrot.slane %v657, 2
  %v660 = vrot.slane %v491, 7
  %v661 = vsel %vm636, %v659, %v660
  %v662 = vrot.slane %v594, 7
  %v663 = vrot.slane %v662, 2
  %v664 = vrot.slane %v595, 7
  %v665 = vsel %vm636, %v663, %v664
  %v666 = vrot.slane %v664, 2
  %v667 = vrot.slane %v596, 7
  %v668 = vsel %vm636, %v666, %v667
  %v669 = vrot.slane %v667, 2
  %v670 = vrot.slane %v493, 7
  %v671 = vsel %vm636, %v669, %v670
  %v672 = vrot.slane %v670, 2
  %v673 = vrot.slane %v597, 7
  %v674 = vsel %vm636, %v672, %v673
  %v675 = vrot.slane %v673, 2
  %v676 = vrot.slane %v598, 7
  %v677 = vsel %vm636, %v675, %v676
  %v678 = vrot.slane %v676, 2
  %v679 = vrot.slane %v599, 7
  %v680 = vsel %vm636, %v678, %v679
  %v681 = vrot.slane %v679, 2
  %v682 = vrot.slane %v496, 7
  %v683 = vsel %vm636, %v681, %v682
  %v684 = vrot.slane %v682, 2
  %v685 = vrot.slane %v600, 7
  %v686 = vsel %vm636, %v684, %v685
  %v703 = vadd.f32 %v430, %v640
  %v704 = vadd.f32 %v559, %v643
  %v705 = vadd.f32 %v560, %v646
  %v706 = vadd.f32 %v561, %v649
  %v707 = vadd.f32 %v432, %v652
  %v708 = vadd.f32 %v562, %v655
  %v709 = vadd.f32 %v563, %v658
  %v710 = vadd.f32 %v564, %v661
  %v711 = vadd.f32 %v565, %v665
  %v712 = vadd.f32 %v566, %v668
  %v713 = vadd.f32 %v567, %v671
  %v714 = vadd.f32 %v437, %v674
  %v715 = vadd.f32 %v568, %v677
  %v716 = vadd.f32 %v569, %v680
  %v717 = vadd.f32 %v570, %v683
  %v718 = vadd.f32 %v440, %v686
  %v719 = vadd.f32 %v703, %v606
  %v720 = vadd.f32 %v704, %v607
  %v721 = vadd.f32 %v705, %v608
  %v722 = vadd.f32 %v706, %v544
  %v723 = vadd.f32 %v707, %v609
  %v724 = vadd.f32 %v708, %v610
  %v725 = vadd.f32 %v709, %v611
  %v726 = vadd.f32 %v710, %v547
  %v727 = vadd.f32 %v711, %v612
  %v728 = vadd.f32 %v712, %v613
  %v729 = vadd.f32 %v713, %v549
  %v730 = vadd.f32 %v714, %v614
  %v731 = vadd.f32 %v715, %v615
  %v732 = vadd.f32 %v716, %v616
  %v733 = vadd.f32 %v717, %v552
  %v734 = vadd.f32 %v718, %v617
  %751 = vst [vmem:[#allocation1] ss:$4 sm:$0xff] %v719
  %s752 = scalar_lea.vmem [#allocation1], 1
  %753 = vst [vmem:[%s752] ss:$4 sm:$0xff] %v720
  %s754 = scalar_lea.vmem [#allocation1], 2
  %755 = vst [vmem:[%s754] ss:$4 sm:$0xff] %v721
  %s756 = scalar_lea.vmem [#allocation1], 3
  %757 = vst [vmem:[%s756] ss:$4 sm:$0xff] %v722
  %s758 = scalar_lea.vmem [#allocation1], 32
  %759 = vst [vmem:[%s758] ss:$4 sm:$0xff] %v723
  %s760 = scalar_lea.vmem [#allocation1], 33
  %761 = vst [vmem:[%s760] ss:$4 sm:$0xff] %v724
  %s762 = scalar_lea.vmem [#allocation1], 34
  %763 = vst [vmem:[%s762] ss:$4 sm:$0xff] %v725
  %s764 = scalar_lea.vmem [#allocation1], 35
  %765 = vst [vmem:[%s764] ss:$4 sm:$0xff] %v726
  %v766 = vld.sshfl [vmem:[#allocation1] sm:$0xff pattern:$0x73625140]
  %v767 = vld.sshfl [vmem:[#allocation1 + $0x20] sm:$0xff pattern:$0x73625140]
  %768 = vst [vmem:[#allocation1] ss:$4 sm:$0xff] %v727
  %769 = vst [vmem:[%s752] ss:$4 sm:$0xff] %v728
  %770 = vst [vmem:[%s754] ss:$4 sm:$0xff] %v729
  %771 = vst [vmem:[%s756] ss:$4 sm:$0xff] %v730
  %772 = vst [vmem:[%s758] ss:$4 sm:$0xff] %v731
  %773 = vst [vmem:[%s760] ss:$4 sm:$0xff] %v732
  %774 = vst [vmem:[%s762] ss:$4 sm:$0xff] %v733
  %775 = vst [vmem:[%s764] ss:$4 sm:$0xff] %v734
  %v776 = vld.sshfl [vmem:[#allocation1] sm:$0xff pattern:$0x73625140]
  %v777 = vld.sshfl [vmem:[#allocation1 + $0x20] sm:$0xff pattern:$0x73625140]
  %v782 = vadd.f32 %v766, %v767
  %v783 = vadd.f32 %v782, %v776
  %v784 = vadd.f32 %v783, %v777
  %v785 = vrot.slane %v784, 4
  %v786 = vadd.f32 %v784, %v785
  %v787 = vrot.slane %v786, 2
  %v788 = vadd.f32 %v786, %v787
  %v789 = vrot.slane %v788, 1
  %v790 = vadd.f32 %v788, %v789
  %v791 = vmul.f32 %v719, %v719
  %v792 = vmul.f32 %v720, %v720
  %v793 = vmul.f32 %v721, %v721
  %v794 = vmul.f32 %v722, %v722
  %v795 = vmul.f32 %v723, %v723
  %v796 = vmul.f32 %v724, %v724
  %v797 = vmul.f32 %v725, %v725
  %v798 = vmul.f32 %v726, %v726
  %v799 = vmul.f32 %v727, %v727
  %v800 = vmul.f32 %v728, %v728
  %v801 = vmul.f32 %v729, %v729
  %v802 = vmul.f32 %v730, %v730
  %v803 = vmul.f32 %v731, %v731
  %v804 = vmul.f32 %v732, %v732
  %v805 = vmul.f32 %v733, %v733
  %v806 = vmul.f32 %v734, %v734
  %823 = vst [vmem:[#allocation1] ss:$4 sm:$0xff] %v791
  %s824 = scalar_lea.vmem [#allocation1], 1
  %825 = vst [vmem:[%s824] ss:$4 sm:$0xff] %v792
  %s826 = scalar_lea.vmem [#allocation1], 2
  %827 = vst [vmem:[%s826] ss:$4 sm:$0xff] %v793
  %s828 = scalar_lea.vmem [#allocation1], 3
  %829 = vst [vmem:[%s828] ss:$4 sm:$0xff] %v794
  %s830 = scalar_lea.vmem [#allocation1], 32
  %831 = vst [vmem:[%s830] ss:$4 sm:$0xff] %v795
  %s832 = scalar_lea.vmem [#allocation1], 33
  %833 = vst [vmem:[%s832] ss:$4 sm:$0xff] %v796
  %s834 = scalar_lea.vmem [#allocation1], 34
  %835 = vst [vmem:[%s834] ss:$4 sm:$0xff] %v797
  %s836 = scalar_lea.vmem [#allocation1], 35
  %837 = vst [vmem:[%s836] ss:$4 sm:$0xff] %v798
  %v838 = vld.sshfl [vmem:[#allocation1] sm:$0xff pattern:$0x73625140]
  %v839 = vld.sshfl [vmem:[#allocation1 + $0x20] sm:$0xff pattern:$0x73625140]
  %840 = vst [vmem:[#allocation1] ss:$4 sm:$0xff] %v799
  %841 = vst [vmem:[%s824] ss:$4 sm:$0xff] %v800
  %842 = vst [vmem:[%s826] ss:$4 sm:$0xff] %v801
  %843 = vst [vmem:[%s828] ss:$4 sm:$0xff] %v802
  %844 = vst [vmem:[%s830] ss:$4 sm:$0xff] %v803
  %845 = vst [vmem:[%s832] ss:$4 sm:$0xff] %v804
  %846 = vst [vmem:[%s834] ss:$4 sm:$0xff] %v805
  %847 = vst [vmem:[%s836] ss:$4 sm:$0xff] %v806
  %v848 = vld.sshfl [vmem:[#allocation1] sm:$0xff pattern:$0x73625140]
  %v849 = vld.sshfl [vmem:[#allocation1 + $0x20] sm:$0xff pattern:$0x73625140]
  %v854 = vadd.f32 %v838, %v839
  %v855 = vadd.f32 %v854, %v848
  %v856 = vadd.f32 %v855, %v849
  %v857 = vrot.slane %v856, 4
  %v858 = vadd.f32 %v856, %v857
  %v859 = vrot.slane %v858, 2
  %v860 = vadd.f32 %v858, %v859
  %v861 = vrot.slane %v860, 1
  %v862 = vadd.f32 %v860, %v861
  %863 = vmatpush.msra.mxu0 %v285
  %864 = vmatpush.msra.mxu0 %v284
  %865 = vmatpush.msra.mxu0 %v283
  %866 = vmatpush.msra.mxu0 %v282
  %867 = vmatpush.msra.mxu0 %v281
  %868 = vmatpush.msra.mxu0 %v280
  %869 = vmatpush.msra.mxu0 %v279
  %870 = vmatpush.msra.mxu0 %v278
  %871 = vmatpush.msra.mxu0 %v277
  %872 = vmatpush.msra.mxu0 %v276
  %873 = vmatpush.msra.mxu0 %v275
  %874 = vmatpush.msra.mxu0 %v274
  %875 = vmatpush.msra.mxu0 %v273
  %876 = vmatpush.msra.mxu0 %v272
  %877 = vmatpush.msra.mxu0 %v271
  %878 = vmatpush.msra.mxu0 %v270
  %879 = vmatmul.f32.gmra.mxu0 %v790
  %v880 = vpop.f32.mrf.mxu0
  %v881 = vadd.f32 0.0, %v880
  %882 = vdwg.mxu0
  %883 = vmatpush.msra.mxu0 %v285
  %884 = vmatpush.msra.mxu0 %v284
  %885 = vmatpush.msra.mxu0 %v283
  %886 = vmatpush.msra.mxu0 %v282
  %887 = vmatpush.msra.mxu0 %v281
  %888 = vmatpush.msra.mxu0 %v280
  %889 = vmatpush.msra.mxu0 %v279
  %890 = vmatpush.msra.mxu0 %v278
  %891 = vmatpush.msra.mxu0 %v277
  %892 = vmatpush.msra.mxu0 %v276
  %893 = vmatpush.msra.mxu0 %v275
  %894 = vmatpush.msra.mxu0 %v274
  %895 = vmatpush.msra.mxu0 %v273
  %896 = vmatpush.msra.mxu0 %v272
  %897 = vmatpush.msra.mxu0 %v271
  %898 = vmatpush.msra.mxu0 %v270
  %899 = vmatmul.f32.gmra.mxu0 %v862
  %v900 = vpop.f32.mrf.mxu0
  %v901 = vadd.f32 0.0, %v900
  %902 = vdwg.mxu0
  %v903 = vmul.f32 %v881, 0.001953125
  %v904 = vmul.f32 %v901, 0.001953125
  %v905 = vmul.f32 %v903, %v903
  %v906 = vsub.f32 %v904, %v905
  %v907 = vld [vmem:[%s2] sm:$0x1]
  %v908 = vadd.f32 %v906, 1e-05
  %v909 = vrsqrt.pop %v908
  %v910 = vmul.f32 %v909, %v908
  %v911 = vmul.f32 %v910, %v909
  %v912 = vmul.f32 0.5, %v911
  %v913 = vsub.f32 1.5, %v912
  %v914 = vmul.f32 %v909, %v913
  %vm915 = vweird.f32 %v908
  %vm916 = vweird.f32 %v909
  %vm917 = vmor %vm915, %vm916
  %v918 = vsel %vm917, %v909, %v914
  %v919 = vmul.f32 %v907, %v918
  %v920 = vld [vmem:[%s3] sm:$0x1]
  %v921 = vmul.f32 %v903, %v919
  %v922 = vsub.f32 %v920, %v921
  %vm923 = vcmask 64512
  %v925 = vsel %vm923, %v919, 0
  %927 = vmatpush.msra.mxu0 0.0
  %928 = vmatpush.msra.mxu0 0.0
  %929 = vmatpush.msra.mxu0 0.0
  %930 = vmatpush.msra.mxu0 0.0
  %931 = vmatpush.msra.mxu0 0.0
  %932 = vmatpush.msra.mxu0 0.0
  %933 = vmatpush.msra.mxu0 0.0
  %934 = vmatpush.msra.mxu0 0.0
  %935 = vmatpush.msra.mxu0 0.0
  %936 = vmatpush.msra.mxu0 0.0
  %937 = vmatpush.msra.mxu0 0.0
  %938 = vmatpush.msra.mxu0 0.0
  %939 = vmatpush.msra.mxu0 0.0
  %940 = vmatpush.msra.mxu0 0.0
  %941 = vmatpush.msra.mxu0 0.0
  %942 = vmatpush.msra.mxu0 %v300
  %943 = vmatmul.f32.gmra.mxu0 %v925
  %v944 = vpop.f32.mrf.mxu0
  %v945 = vadd.f32 0.0, %v944
  %946 = vdwg.mxu0
  %v948 = vsel %vm923, %v922, 0
  %950 = vmatpush.msra.mxu0 0.0
  %951 = vmatpush.msra.mxu0 0.0
  %952 = vmatpush.msra.mxu0 0.0
  %953 = vmatpush.msra.mxu0 0.0
  %954 = vmatpush.msra.mxu0 0.0
  %955 = vmatpush.msra.mxu0 0.0
  %956 = vmatpush.msra.mxu0 0.0
  %957 = vmatpush.msra.mxu0 0.0
  %958 = vmatpush.msra.mxu0 0.0
  %959 = vmatpush.msra.mxu0 0.0
  %960 = vmatpush.msra.mxu0 0.0
  %961 = vmatpush.msra.mxu0 0.0
  %962 = vmatpush.msra.mxu0 0.0
  %963 = vmatpush.msra.mxu0 0.0
  %964 = vmatpush.msra.mxu0 0.0
  %965 = vmatpush.msra.mxu0 %v300
  %966 = vmatmul.f32.gmra.mxu0 %v948
  %v967 = vpop.f32.mrf.mxu0
  %v968 = vadd.f32 0.0, %v967
  %969 = vdwg.mxu0
  %v970 = vperm.slane %v945, 0
  %v972 = vrot.slane %v970, 2
  %v973 = vrot.slane %v970, 4
  %v974 = vrot.slane %v970, 6
  %v978 = vmul.f32 %v719, %v970
  %v979 = vmul.f32 %v720, %v972
  %v980 = vmul.f32 %v721, %v973
  %v981 = vmul.f32 %v722, %v974
  %v982 = vmul.f32 %v723, %v970
  %v983 = vmul.f32 %v724, %v972
  %v984 = vmul.f32 %v725, %v973
  %v985 = vmul.f32 %v726, %v974
  %v986 = vmul.f32 %v727, %v970
  %v987 = vmul.f32 %v728, %v972
  %v988 = vmul.f32 %v729, %v973
  %v989 = vmul.f32 %v730, %v974
  %v990 = vmul.f32 %v731, %v970
  %v991 = vmul.f32 %v732, %v972
  %v992 = vmul.f32 %v733, %v973
  %v993 = vmul.f32 %v734, %v974
  %v994 = vperm.slane %v968, 0
  %v996 = vrot.slane %v994, 2
  %v997 = vrot.slane %v994, 4
  %v998 = vrot.slane %v994, 6
  %v1002 = vadd.f32 %v978, %v994
  %v1003 = vadd.f32 %v979, %v996
  %v1004 = vadd.f32 %v980, %v997
  %v1005 = vadd.f32 %v981, %v998
  %v1006 = vadd.f32 %v982, %v994
  %v1007 = vadd.f32 %v983, %v996
  %v1008 = vadd.f32 %v984, %v997
  %v1009 = vadd.f32 %v985, %v998
  %v1010 = vadd.f32 %v986, %v994
  %v1011 = vadd.f32 %v987, %v996
  %v1012 = vadd.f32 %v988, %v997
  %v1013 = vadd.f32 %v989, %v998
  %v1014 = vadd.f32 %v990, %v994
  %v1015 = vadd.f32 %v991, %v996
  %v1016 = vadd.f32 %v992, %v997
  %v1017 = vadd.f32 %v993, %v998
  %v1018 = vmax.f32 %v1002, 0.0
  %v1019 = vmax.f32 %v1003, 0.0
  %v1020 = vmax.f32 %v1004, 0.0
  %v1021 = vmax.f32 %v1005, 0.0
  %v1022 = vmax.f32 %v1006, 0.0
  %v1023 = vmax.f32 %v1007, 0.0
  %v1024 = vmax.f32 %v1008, 0.0
  %v1025 = vmax.f32 %v1009, 0.0
  %v1026 = vmax.f32 %v1010, 0.0
  %v1027 = vmax.f32 %v1011, 0.0
  %v1028 = vmax.f32 %v1012, 0.0
  %v1029 = vmax.f32 %v1013, 0.0
  %v1030 = vmax.f32 %v1014, 0.0
  %v1031 = vmax.f32 %v1015, 0.0
  %v1032 = vmax.f32 %v1016, 0.0
  %v1033 = vmax.f32 %v1017, 0.0
  %1034 = vst [vmem:[#allocation3] sm:$0xff] 0.0
  %1035 = vst [vmem:[#allocation3 + $0x8] sm:$0xff] 0.0
  %1036 = vst [vmem:[#allocation3 + $0x10] sm:$0x3] 0.0
  %1037 = vst [vmem:[#allocation3 + $0x18] sm:$0xff] 0.0
  %1038 = vst [vmem:[#allocation3 + $0x20] sm:$0xff] 0.0
  %1039 = vst [vmem:[#allocation3 + $0x28] sm:$0x3] 0.0
  %1056 = vst [vmem:[#allocation1] ss:$4 sm:$0xff] %v1018
  %s1057 = scalar_lea.vmem [#allocation1], 1
  %1058 = vst [vmem:[%s1057] ss:$4 sm:$0xff] %v1019
  %s1059 = scalar_lea.vmem [#allocation1], 2
  %1060 = vst [vmem:[%s1059] ss:$4 sm:$0xff] %v1020
  %s1061 = scalar_lea.vmem [#allocation1], 3
  %1062 = vst [vmem:[%s1061] ss:$4 sm:$0xff] %v1021
  %s1063 = scalar_lea.vmem [#allocation1], 32
  %1064 = vst [vmem:[%s1063] ss:$4 sm:$0xff] %v1022
  %s1065 = scalar_lea.vmem [#allocation1], 33
  %1066 = vst [vmem:[%s1065] ss:$4 sm:$0xff] %v1023
  %s1067 = scalar_lea.vmem [#allocation1], 34
  %1068 = vst [vmem:[%s1067] ss:$4 sm:$0xff] %v1024
  %s1069 = scalar_lea.vmem [#allocation1], 35
  %1070 = vst [vmem:[%s1069] ss:$4 sm:$0xff] %v1025
  %v1071 = vld.sshfl [vmem:[#allocation1] sm:$0xff pattern:$0x73625140]
  %v1072 = vld.sshfl [vmem:[#allocation1 + $0x20] sm:$0xff pattern:$0x73625140]
  %1073 = vst [vmem:[#allocation1] ss:$4 sm:$0xff] %v1026
  %1074 = vst [vmem:[%s1057] ss:$4 sm:$0xff] %v1027
  %1075 = vst [vmem:[%s1059] ss:$4 sm:$0xff] %v1028
  %1076 = vst [vmem:[%s1061] ss:$4 sm:$0xff] %v1029
  %1077 = vst [vmem:[%s1063] ss:$4 sm:$0xff] %v1030
  %1078 = vst [vmem:[%s1065] ss:$4 sm:$0xff] %v1031
  %1079 = vst [vmem:[%s1067] ss:$4 sm:$0xff] %v1032
  %1080 = vst [vmem:[%s1069] ss:$4 sm:$0xff] %v1033
  %v1081 = vld.sshfl [vmem:[#allocation1] sm:$0xff pattern:$0x73625140]
  %v1082 = vld.sshfl [vmem:[#allocation1 + $0x20] sm:$0xff pattern:$0x73625140]
  %1087 = vst [vmem:[#allocation3 + $0x1] sm:$0xff] %v1071
  %1088 = vst [vmem:[#allocation3 + $0x9] sm:$0xff] %v1072
  %1089 = vst [vmem:[#allocation3 + $0x19] sm:$0xff] %v1081
  %1090 = vst [vmem:[#allocation3 + $0x21] sm:$0xff] %v1082
  %v1091 = vld [vmem:[#allocation3] sm:$0xff]
  %v1092 = vld [vmem:[#allocation3 + $0x8] sm:$0xff]
  %v1093 = vld [vmem:[#allocation3 + $0x10] sm:$0x3]
  %v1094 = vld [vmem:[#allocation3 + $0x18] sm:$0xff]
  %v1095 = vld [vmem:[#allocation3 + $0x20] sm:$0xff]
  %v1096 = vld [vmem:[#allocation3 + $0x28] sm:$0x3]
  %v1103 = vrot.slane %v1091, 2
  %v1104 = vrot.slane %v1091, 4
  %v1105 = vrot.slane %v1091, 6
  %v1106 = vrot.slane %v1092, 2
  %v1107 = vrot.slane %v1092, 4
  %v1108 = vrot.slane %v1092, 6
  %v1109 = vrot.slane %v1094, 2
  %v1110 = vrot.slane %v1094, 4
  %v1111 = vrot.slane %v1094, 6
  %v1112 = vrot.slane %v1095, 2
  %v1113 = vrot.slane %v1095, 4
  %v1114 = vrot.slane %v1095, 6
  %1115 = vst [vmem:[#allocation1] ss:$4 sm:$0xff] %v1091
  %s1116 = scalar_lea.vmem [#allocation1], 1
  %1117 = vst [vmem:[%s1116] ss:$4 sm:$0xff] %v1103
  %s1118 = scalar_lea.vmem [#allocation1], 2
  %1119 = vst [vmem:[%s1118] ss:$4 sm:$0xff] %v1104
  %s1120 = scalar_lea.vmem [#allocation1], 3
  %1121 = vst [vmem:[%s1120] ss:$4 sm:$0xff] %v1105
  %s1122 = scalar_lea.vmem [#allocation1], 32
  %1123 = vst [vmem:[%s1122] ss:$4 sm:$0xff] %v1092
  %s1124 = scalar_lea.vmem [#allocation1], 33
  %1125 = vst [vmem:[%s1124] ss:$4 sm:$0xff] %v1106
  %s1126 = scalar_lea.vmem [#allocation1], 34
  %1127 = vst [vmem:[%s1126] ss:$4 sm:$0xff] %v1107
  %s1128 = scalar_lea.vmem [#allocation1], 35
  %1129 = vst [vmem:[%s1128] ss:$4 sm:$0xff] %v1108
  %v1130 = vld.sshfl [vmem:[#allocation1] sm:$0xff pattern:$0x73625140]
  %v1131 = vld.sshfl [vmem:[#allocation1 + $0x20] sm:$0xff pattern:$0x73625140]
  %1132 = vst [vmem:[#allocation1] ss:$4 sm:$0xff] %v1093
  %1133 = vst [vmem:[%s1116] ss:$4 sm:$0xff] %v1094
  %1134 = vst [vmem:[%s1118] ss:$4 sm:$0xff] %v1109
  %1135 = vst [vmem:[%s1120] ss:$4 sm:$0xff] %v1110
  %1136 = vst [vmem:[%s1122] ss:$4 sm:$0xff] %v1111
  %1137 = vst [vmem:[%s1124] ss:$4 sm:$0xff] %v1095
  %1138 = vst [vmem:[%s1126] ss:$4 sm:$0xff] %v1112
  %1139 = vst [vmem:[%s1128] ss:$4 sm:$0xff] %v1113
  %v1140 = vld.sshfl [vmem:[#allocation1] sm:$0xff pattern:$0x73625140]
  %v1141 = vld.sshfl [vmem:[#allocation1 + $0x20] sm:$0xff pattern:$0x73625140]
  %1142 = vst [vmem:[#allocation1] ss:$4 sm:$0xff] %v1114
  %1143 = vst [vmem:[%s1116] ss:$4 sm:$0xff] %v1096
  %v1144 = vld.sshfl [vmem:[#allocation1] sm:$0xff pattern:$0x73625140]
  %v1150 = vpack.c.bf16 %v1131, %v1130
  %v1151 = vpack.c.bf16 %v1141, %v1140
  %v1152 = vpack.c.bf16 %v1144, %v1144
  %v1153 = vld [vmem:[%s4] sm:$0xf]
  %v1154 = vld [vmem:[%s4 + $0x4] sm:$0xf]
  %v1155 = vld [vmem:[%s4 + $0x8] sm:$0xf]
  %v1156 = vld [vmem:[%s4 + $0xc] sm:$0xf]
  %v1157 = vld [vmem:[%s4 + $0x10] sm:$0xf]
  %v1158 = vld [vmem:[%s4 + $0x14] sm:$0xf]
  %v1159 = vld [vmem:[%s4 + $0x18] sm:$0xf]
  %v1160 = vld [vmem:[%s4 + $0x1c] sm:$0xf]
  %v1161 = vld [vmem:[%s4 + $0x20] sm:$0xf]
  %v1162 = vld [vmem:[%s4 + $0x24] sm:$0xf]
  %v1163 = vld [vmem:[%s4 + $0x28] sm:$0xf]
  %v1164 = vld [vmem:[%s4 + $0x2c] sm:$0xf]
  %v1165 = vld [vmem:[%s4 + $0x30] sm:$0xf]
  %v1166 = vld [vmem:[%s4 + $0x34] sm:$0xf]
  %v1167 = vld [vmem:[%s4 + $0x38] sm:$0xf]
  %v1168 = vld [vmem:[%s4 + $0x3c] sm:$0xf]
  %v1185 = vunpack.c.l.b16 %v1153
  %v1186 = vunpack.c.l.b16 %v1154
  %v1187 = vunpack.c.l.b16 %v1155
  %v1188 = vunpack.c.l.b16 %v1156
  %v1189 = vunpack.c.l.b16 %v1157
  %v1190 = vunpack.c.l.b16 %v1158
  %v1191 = vunpack.c.l.b16 %v1159
  %v1192 = vunpack.c.l.b16 %v1160
  %v1193 = vunpack.c.l.b16 %v1161
  %v1194 = vunpack.c.l.b16 %v1162
  %v1195 = vunpack.c.l.b16 %v1163
  %v1196 = vunpack.c.l.b16 %v1164
  %v1197 = vunpack.c.l.b16 %v1165
  %v1198 = vunpack.c.l.b16 %v1166
  %v1199 = vunpack.c.l.b16 %v1167
  %v1200 = vunpack.c.l.b16 %v1168
  %v1201 = vpack.c.b16 %v1186, %v1185
  %v1202 = vpack.c.b16 %v1188, %v1187
  %v1203 = vpack.c.b16 %v1190, %v1189
  %v1204 = vpack.c.b16 %v1192, %v1191
  %v1205 = vpack.c.b16 %v1194, %v1193
  %v1206 = vpack.c.b16 %v1196, %v1195
  %v1207 = vpack.c.b16 %v1198, %v1197
  %v1208 = vpack.c.b16 %v1200, %v1199
  %1217 = vmatpush.bf16.msra.mxu0 %v1208
  %1218 = vmatpush.bf16.msra.mxu0 %v1207
  %1219 = vmatpush.bf16.msra.mxu0 %v1206
  %1220 = vmatpush.bf16.msra.mxu0 %v1205
  %1221 = vmatpush.bf16.msra.mxu0 %v1204
  %1222 = vmatpush.bf16.msra.mxu0 %v1203
  %1223 = vmatpush.bf16.msra.mxu0 %v1202
  %1224 = vmatpush.bf16.msra.mxu0 %v1201
  %1225 = vmatmul.bf16.gmra.mxu0 %v1150
  %v1226 = vpop.f32.mrf.mxu0
  %v1227 = vadd.f32 0.0, %v1226
  %v1228 = vpop.f32.mrf.mxu0
  %v1229 = vadd.f32 0.0, %v1228
  %1230 = vmatmul.bf16.gmra.mxu0 %v1151
  %v1231 = vpop.f32.mrf.mxu0
  %v1232 = vadd.f32 0.0, %v1231
  %v1233 = vpop.f32.mrf.mxu0
  %v1234 = vadd.f32 0.0, %v1233
  %1235 = vmatmul.bf16.gmra.mxu0 %v1152
  %v1236 = vpop.f32.mrf.mxu0
  %v1237 = vadd.f32 0.0, %v1236
  %v1238 = vpop.f32.mrf.mxu0
  %1239 = vdwg.mxu0
  %s1240 = scalar_lea.vmem %s4, 64
  %v1241 = vld [vmem:[%s1240] sm:$0xf]
  %v1242 = vld [vmem:[%s1240 + $0x4] sm:$0xf]
  %v1243 = vld [vmem:[%s1240 + $0x8] sm:$0xf]
  %v1244 = vld [vmem:[%s1240 + $0xc] sm:$0xf]
  %v1245 = vld [vmem:[%s1240 + $0x10] sm:$0xf]
  %v1246 = vld [vmem:[%s1240 + $0x14] sm:$0xf]
  %v1247 = vld [vmem:[%s1240 + $0x18] sm:$0xf]
  %v1248 = vld [vmem:[%s1240 + $0x1c] sm:$0xf]
  %v1249 = vld [vmem:[%s1240 + $0x20] sm:$0xf]
  %v1250 = vld [vmem:[%s1240 + $0x24] sm:$0xf]
  %v1251 = vld [vmem:[%s1240 + $0x28] sm:$0xf]
  %v1252 = vld [vmem:[%s1240 + $0x2c] sm:$0xf]
  %v1253 = vld [vmem:[%s1240 + $0x30] sm:$0xf]
  %v1254 = vld [vmem:[%s1240 + $0x34] sm:$0xf]
  %v1255 = vld [vmem:[%s1240 + $0x38] sm:$0xf]
  %v1256 = vld [vmem:[%s1240 + $0x3c] sm:$0xf]
  %v1273 = vunpack.c.l.b16 %v1241
  %v1274 = vunpack.c.l.b16 %v1242
  %v1275 = vunpack.c.l.b16 %v1243
  %v1276 = vunpack.c.l.b16 %v1244
  %v1277 = vunpack.c.l.b16 %v1245
  %v1278 = vunpack.c.l.b16 %v1246
  %v1279 = vunpack.c.l.b16 %v1247
  %v1280 = vunpack.c.l.b16 %v1248
  %v1281 = vunpack.c.l.b16 %v1249
  %v1282 = vunpack.c.l.b16 %v1250
  %v1283 = vunpack.c.l.b16 %v1251
  %v1284 = vunpack.c.l.b16 %v1252
  %v1285 = vunpack.c.l.b16 %v1253
  %v1286 = vunpack.c.l.b16 %v1254
  %v1287 = vunpack.c.l.b16 %v1255
  %v1288 = vunpack.c.l.b16 %v1256
  %v1289 = vpack.c.b16 %v1274, %v1273
  %v1290 = vpack.c.b16 %v1276, %v1275
  %v1291 = vpack.c.b16 %v1278, %v1277
  %v1292 = vpack.c.b16 %v1280, %v1279
  %v1293 = vpack.c.b16 %v1282, %v1281
  %v1294 = vpack.c.b16 %v1284, %v1283
  %v1295 = vpack.c.b16 %v1286, %v1285
  %v1296 = vpack.c.b16 %v1288, %v1287
  %1305 = vmatpush.bf16.msra.mxu0 %v1296
  %1306 = vmatpush.bf16.msra.mxu0 %v1295
  %1307 = vmatpush.bf16.msra.mxu0 %v1294
  %1308 = vmatpush.bf16.msra.mxu0 %v1293
  %1309 = vmatpush.bf16.msra.mxu0 %v1292
  %1310 = vmatpush.bf16.msra.mxu0 %v1291
  %1311 = vmatpush.bf16.msra.mxu0 %v1290
  %1312 = vmatpush.bf16.msra.mxu0 %v1289
  %1313 = vmatmul.bf16.gmra.mxu0 %v1150
  %v1314 = vpop.f32.mrf.mxu0
  %v1315 = vadd.f32 0.0, %v1314
  %v1316 = vpop.f32.mrf.mxu0
  %v1317 = vadd.f32 0.0, %v1316
  %1318 = vmatmul.bf16.gmra.mxu0 %v1151
  %v1319 = vpop.f32.mrf.mxu0
  %v1320 = vadd.f32 0.0, %v1319
  %v1321 = vpop.f32.mrf.mxu0
  %v1322 = vadd.f32 0.0, %v1321
  %1323 = vmatmul.bf16.gmra.mxu0 %v1152
  %v1324 = vpop.f32.mrf.mxu0
  %v1325 = vadd.f32 0.0, %v1324
  %v1326 = vpop.f32.mrf.mxu0
  %1327 = vdwg.mxu0
  %s1328 = scalar_lea.vmem %s4, 128
  %v1329 = vld [vmem:[%s1328] sm:$0xf]
  %v1330 = vld [vmem:[%s1328 + $0x4] sm:$0xf]
  %v1331 = vld [vmem:[%s1328 + $0x8] sm:$0xf]
  %v1332 = vld [vmem:[%s1328 + $0xc] sm:$0xf]
  %v1333 = vld [vmem:[%s1328 + $0x10] sm:$0xf]
  %v1334 = vld [vmem:[%s1328 + $0x14] sm:$0xf]
  %v1335 = vld [vmem:[%s1328 + $0x18] sm:$0xf]
  %v1336 = vld [vmem:[%s1328 + $0x1c] sm:$0xf]
  %v1337 = vld [vmem:[%s1328 + $0x20] sm:$0xf]
  %v1338 = vld [vmem:[%s1328 + $0x24] sm:$0xf]
  %v1339 = vld [vmem:[%s1328 + $0x28] sm:$0xf]
  %v1340 = vld [vmem:[%s1328 + $0x2c] sm:$0xf]
  %v1341 = vld [vmem:[%s1328 + $0x30] sm:$0xf]
  %v1342 = vld [vmem:[%s1328 + $0x34] sm:$0xf]
  %v1343 = vld [vmem:[%s1328 + $0x38] sm:$0xf]
  %v1344 = vld [vmem:[%s1328 + $0x3c] sm:$0xf]
  %v1361 = vunpack.c.l.b16 %v1329
  %v1362 = vunpack.c.l.b16 %v1330
  %v1363 = vunpack.c.l.b16 %v1331
  %v1364 = vunpack.c.l.b16 %v1332
  %v1365 = vunpack.c.l.b16 %v1333
  %v1366 = vunpack.c.l.b16 %v1334
  %v1367 = vunpack.c.l.b16 %v1335
  %v1368 = vunpack.c.l.b16 %v1336
  %v1369 = vunpack.c.l.b16 %v1337
  %v1370 = vunpack.c.l.b16 %v1338
  %v1371 = vunpack.c.l.b16 %v1339
  %v1372 = vunpack.c.l.b16 %v1340
  %v1373 = vunpack.c.l.b16 %v1341
  %v1374 = vunpack.c.l.b16 %v1342
  %v1375 = vunpack.c.l.b16 %v1343
  %v1376 = vunpack.c.l.b16 %v1344
  %v1377 = vpack.c.b16 %v1362, %v1361
  %v1378 = vpack.c.b16 %v1364, %v1363
  %v1379 = vpack.c.b16 %v1366, %v1365
  %v1380 = vpack.c.b16 %v1368, %v1367
  %v1381 = vpack.c.b16 %v1370, %v1369
  %v1382 = vpack.c.b16 %v1372, %v1371
  %v1383 = vpack.c.b16 %v1374, %v1373
  %v1384 = vpack.c.b16 %v1376, %v1375
  %1393 = vmatpush.bf16.msra.mxu0 %v1384
  %1394 = vmatpush.bf16.msra.mxu0 %v1383
  %1395 = vmatpush.bf16.msra.mxu0 %v1382
  %1396 = vmatpush.bf16.msra.mxu0 %v1381
  %1397 = vmatpush.bf16.msra.mxu0 %v1380
  %1398 = vmatpush.bf16.msra.mxu0 %v1379
  %1399 = vmatpush.bf16.msra.mxu0 %v1378
  %1400 = vmatpush.bf16.msra.mxu0 %v1377
  %1401 = vmatmul.bf16.gmra.mxu0 %v1150
  %v1402 = vpop.f32.mrf.mxu0
  %v1403 = vadd.f32 0.0, %v1402
  %v1404 = vpop.f32.mrf.mxu0
  %v1405 = vadd.f32 0.0, %v1404
  %1406 = vmatmul.bf16.gmra.mxu0 %v1151
  %v1407 = vpop.f32.mrf.mxu0
  %v1408 = vadd.f32 0.0, %v1407
  %v1409 = vpop.f32.mrf.mxu0
  %v1410 = vadd.f32 0.0, %v1409
  %1411 = vmatmul.bf16.gmra.mxu0 %v1152
  %v1412 = vpop.f32.mrf.mxu0
  %v1413 = vadd.f32 0.0, %v1412
  %v1414 = vpop.f32.mrf.mxu0
  %1415 = vdwg.mxu0
  %v1420 = vrot.slane %v1227, 2
  %v1421 = vrot.slane %v1227, 4
  %v1422 = vrot.slane %v1227, 6
  %v1423 = vrot.slane %v1229, 2
  %v1424 = vrot.slane %v1229, 4
  %v1425 = vrot.slane %v1229, 6
  %v1426 = vrot.slane %v1232, 2
  %v1427 = vrot.slane %v1232, 4
  %v1428 = vrot.slane %v1232, 6
  %v1429 = vrot.slane %v1234, 2
  %v1430 = vrot.slane %v1234, 4
  %v1431 = vrot.slane %v1234, 6
  %v1449 = vrot.slane %v1315, 2
  %v1450 = vrot.slane %v1315, 4
  %v1451 = vrot.slane %v1315, 6
  %v1452 = vrot.slane %v1317, 2
  %v1453 = vrot.slane %v1317, 4
  %v1454 = vrot.slane %v1317, 6
  %v1455 = vrot.slane %v1320, 2
  %v1456 = vrot.slane %v1320, 4
  %v1457 = vrot.slane %v1320, 6
  %v1458 = vrot.slane %v1322, 2
  %v1459 = vrot.slane %v1322, 4
  %v1460 = vrot.slane %v1322, 6
  %v1461 = vrot.slane %v1325, 2
  %v1467 = vrot.slane %v1403, 2
  %v1468 = vrot.slane %v1403, 4
  %v1469 = vrot.slane %v1403, 6
  %v1470 = vrot.slane %v1405, 2
  %v1471 = vrot.slane %v1405, 4
  %v1472 = vrot.slane %v1405, 6
  %v1473 = vrot.slane %v1408, 4
  %v1474 = vrot.slane %v1408, 6
  %v1475 = vrot.slane %v1410, 2
  %v1476 = vrot.slane %v1410, 4
  %v1477 = vrot.slane %v1410, 6
  %v1478 = vrot.slane %v1413, 2
  %v1491 = vrot.slane %v1315, 7
  %v1492 = vrot.slane %v1491, 2
  %v1493 = vrot.slane %v1449, 7
  %v1494 = vsel %vm636, %v1492, %v1493
  %v1495 = vrot.slane %v1493, 2
  %v1496 = vrot.slane %v1450, 7
  %v1497 = vsel %vm636, %v1495, %v1496
  %v1498 = vrot.slane %v1496, 2
  %v1499 = vrot.slane %v1451, 7
  %v1500 = vsel %vm636, %v1498, %v1499
  %v1501 = vrot.slane %v1499, 2
  %v1502 = vrot.slane %v1317, 7
  %v1503 = vsel %vm636, %v1501, %v1502
  %v1504 = vrot.slane %v1502, 2
  %v1505 = vrot.slane %v1452, 7
  %v1506 = vsel %vm636, %v1504, %v1505
  %v1507 = vrot.slane %v1505, 2
  %v1508 = vrot.slane %v1453, 7
  %v1509 = vsel %vm636, %v1507, %v1508
  %v1510 = vrot.slane %v1508, 2
  %v1511 = vrot.slane %v1454, 7
  %v1512 = vsel %vm636, %v1510, %v1511
  %v1513 = vrot.slane %v1511, 2
  %v1514 = vrot.slane %v1320, 7
  %v1515 = vsel %vm636, %v1513, %v1514
  %v1516 = vrot.slane %v1455, 7
  %v1517 = vrot.slane %v1516, 2
  %v1518 = vrot.slane %v1456, 7
  %v1519 = vsel %vm636, %v1517, %v1518
  %v1520 = vrot.slane %v1518, 2
  %v1521 = vrot.slane %v1457, 7
  %v1522 = vsel %vm636, %v1520, %v1521
  %v1523 = vrot.slane %v1521, 2
  %v1524 = vrot.slane %v1322, 7
  %v1525 = vsel %vm636, %v1523, %v1524
  %v1526 = vrot.slane %v1524, 2
  %v1527 = vrot.slane %v1458, 7
  %v1528 = vsel %vm636, %v1526, %v1527
  %v1529 = vrot.slane %v1527, 2
  %v1530 = vrot.slane %v1459, 7
  %v1531 = vsel %vm636, %v1529, %v1530
  %v1532 = vrot.slane %v1530, 2
  %v1533 = vrot.slane %v1460, 7
  %v1534 = vsel %vm636, %v1532, %v1533
  %v1535 = vrot.slane %v1533, 2
  %v1536 = vrot.slane %v1325, 7
  %v1537 = vsel %vm636, %v1535, %v1536
  %v1538 = vrot.slane %v1536, 2
  %v1539 = vrot.slane %v1461, 7
  %v1540 = vsel %vm636, %v1538, %v1539
  %v1557 = vadd.f32 %v1227, %v1494
  %v1558 = vadd.f32 %v1420, %v1497
  %v1559 = vadd.f32 %v1421, %v1500
  %v1560 = vadd.f32 %v1422, %v1503
  %v1561 = vadd.f32 %v1229, %v1506
  %v1562 = vadd.f32 %v1423, %v1509
  %v1563 = vadd.f32 %v1424, %v1512
  %v1564 = vadd.f32 %v1425, %v1515
  %v1565 = vadd.f32 %v1426, %v1519
  %v1566 = vadd.f32 %v1427, %v1522
  %v1567 = vadd.f32 %v1428, %v1525
  %v1568 = vadd.f32 %v1234, %v1528
  %v1569 = vadd.f32 %v1429, %v1531
  %v1570 = vadd.f32 %v1430, %v1534
  %v1571 = vadd.f32 %v1431, %v1537
  %v1572 = vadd.f32 %v1237, %v1540
  %v1573 = vadd.f32 %v1557, %v1467
  %v1574 = vadd.f32 %v1558, %v1468
  %v1575 = vadd.f32 %v1559, %v1469
  %v1576 = vadd.f32 %v1560, %v1405
  %v1577 = vadd.f32 %v1561, %v1470
  %v1578 = vadd.f32 %v1562, %v1471
  %v1579 = vadd.f32 %v1563, %v1472
  %v1580 = vadd.f32 %v1564, %v1408
  %v1581 = vadd.f32 %v1565, %v1473
  %v1582 = vadd.f32 %v1566, %v1474
  %v1583 = vadd.f32 %v1567, %v1410
  %v1584 = vadd.f32 %v1568, %v1475
  %v1585 = vadd.f32 %v1569, %v1476
  %v1586 = vadd.f32 %v1570, %v1477
  %v1587 = vadd.f32 %v1571, %v1413
  %v1588 = vadd.f32 %v1572, %v1478
  %1605 = vst [vmem:[#allocation1] ss:$4 sm:$0xff] %v1573
  %s1606 = scalar_lea.vmem [#allocation1], 1
  %1607 = vst [vmem:[%s1606] ss:$4 sm:$0xff] %v1574
  %s1608 = scalar_lea.vmem [#allocation1], 2
  %1609 = vst [vmem:[%s1608] ss:$4 sm:$0xff] %v1575
  %s1610 = scalar_lea.vmem [#allocation1], 3
  %1611 = vst [vmem:[%s1610] ss:$4 sm:$0xff] %v1576
  %s1612 = scalar_lea.vmem [#allocation1], 32
  %1613 = vst [vmem:[%s1612] ss:$4 sm:$0xff] %v1577
  %s1614 = scalar_lea.vmem [#allocation1], 33
  %1615 = vst [vmem:[%s1614] ss:$4 sm:$0xff] %v1578
  %s1616 = scalar_lea.vmem [#allocation1], 34
  %1617 = vst [vmem:[%s1616] ss:$4 sm:$0xff] %v1579
  %s1618 = scalar_lea.vmem [#allocation1], 35
  %1619 = vst [vmem:[%s1618] ss:$4 sm:$0xff] %v1580
  %v1620 = vld.sshfl [vmem:[#allocation1] sm:$0xff pattern:$0x73625140]
  %v1621 = vld.sshfl [vmem:[#allocation1 + $0x20] sm:$0xff pattern:$0x73625140]
  %1622 = vst [vmem:[#allocation1] ss:$4 sm:$0xff] %v1581
  %1623 = vst [vmem:[%s1606] ss:$4 sm:$0xff] %v1582
  %1624 = vst [vmem:[%s1608] ss:$4 sm:$0xff] %v1583
  %1625 = vst [vmem:[%s1610] ss:$4 sm:$0xff] %v1584
  %1626 = vst [vmem:[%s1612] ss:$4 sm:$0xff] %v1585
  %1627 = vst [vmem:[%s1614] ss:$4 sm:$0xff] %v1586
  %1628 = vst [vmem:[%s1616] ss:$4 sm:$0xff] %v1587
  %1629 = vst [vmem:[%s1618] ss:$4 sm:$0xff] %v1588
  %v1630 = vld.sshfl [vmem:[#allocation1] sm:$0xff pattern:$0x73625140]
  %v1631 = vld.sshfl [vmem:[#allocation1 + $0x20] sm:$0xff pattern:$0x73625140]
  %v1636 = vadd.f32 %v1620, %v1621
  %v1637 = vadd.f32 %v1636, %v1630
  %v1638 = vadd.f32 %v1637, %v1631
  %v1639 = vrot.slane %v1638, 4
  %v1640 = vadd.f32 %v1638, %v1639
  %v1641 = vrot.slane %v1640, 2
  %v1642 = vadd.f32 %v1640, %v1641
  %v1643 = vrot.slane %v1642, 1
  %v1644 = vadd.f32 %v1642, %v1643
  %v1645 = vmul.f32 %v1573, %v1573
  %v1646 = vmul.f32 %v1574, %v1574
  %v1647 = vmul.f32 %v1575, %v1575
  %v1648 = vmul.f32 %v1576, %v1576
  %v1649 = vmul.f32 %v1577, %v1577
  %v1650 = vmul.f32 %v1578, %v1578
  %v1651 = vmul.f32 %v1579, %v1579
  %v1652 = vmul.f32 %v1580, %v1580
  %v1653 = vmul.f32 %v1581, %v1581
  %v1654 = vmul.f32 %v1582, %v1582
  %v1655 = vmul.f32 %v1583, %v1583
  %v1656 = vmul.f32 %v1584, %v1584
  %v1657 = vmul.f32 %v1585, %v1585
  %v1658 = vmul.f32 %v1586, %v1586
  %v1659 = vmul.f32 %v1587, %v1587
  %v1660 = vmul.f32 %v1588, %v1588
  %1677 = vst [vmem:[#allocation1] ss:$4 sm:$0xff] %v1645
  %s1678 = scalar_lea.vmem [#allocation1], 1
  %1679 = vst [vmem:[%s1678] ss:$4 sm:$0xff] %v1646
  %s1680 = scalar_lea.vmem [#allocation1], 2
  %1681 = vst [vmem:[%s1680] ss:$4 sm:$0xff] %v1647
  %s1682 = scalar_lea.vmem [#allocation1], 3
  %1683 = vst [vmem:[%s1682] ss:$4 sm:$0xff] %v1648
  %s1684 = scalar_lea.vmem [#allocation1], 32
  %1685 = vst [vmem:[%s1684] ss:$4 sm:$0xff] %v1649
  %s1686 = scalar_lea.vmem [#allocation1], 33
  %1687 = vst [vmem:[%s1686] ss:$4 sm:$0xff] %v1650
  %s1688 = scalar_lea.vmem [#allocation1], 34
  %1689 = vst [vmem:[%s1688] ss:$4 sm:$0xff] %v1651
  %s1690 = scalar_lea.vmem [#allocation1], 35
  %1691 = vst [vmem:[%s1690] ss:$4 sm:$0xff] %v1652
  %v1692 = vld.sshfl [vmem:[#allocation1] sm:$0xff pattern:$0x73625140]
  %v1693 = vld.sshfl [vmem:[#allocation1 + $0x20] sm:$0xff pattern:$0x73625140]
  %1694 = vst [vmem:[#allocation1] ss:$4 sm:$0xff] %v1653
  %1695 = vst [vmem:[%s1678] ss:$4 sm:$0xff] %v1654
  %1696 = vst [vmem:[%s1680] ss:$4 sm:$0xff] %v1655
  %1697 = vst [vmem:[%s1682] ss:$4 sm:$0xff] %v1656
  %1698 = vst [vmem:[%s1684] ss:$4 sm:$0xff] %v1657
  %1699 = vst [vmem:[%s1686] ss:$4 sm:$0xff] %v1658
  %1700 = vst [vmem:[%s1688] ss:$4 sm:$0xff] %v1659
  %1701 = vst [vmem:[%s1690] ss:$4 sm:$0xff] %v1660
  %v1702 = vld.sshfl [vmem:[#allocation1] sm:$0xff pattern:$0x73625140]
  %v1703 = vld.sshfl [vmem:[#allocation1 + $0x20] sm:$0xff pattern:$0x73625140]
  %v1708 = vadd.f32 %v1692, %v1693
  %v1709 = vadd.f32 %v1708, %v1702
  %v1710 = vadd.f32 %v1709, %v1703
  %v1711 = vrot.slane %v1710, 4
  %v1712 = vadd.f32 %v1710, %v1711
  %v1713 = vrot.slane %v1712, 2
  %v1714 = vadd.f32 %v1712, %v1713
  %v1715 = vrot.slane %v1714, 1
  %v1716 = vadd.f32 %v1714, %v1715
  %1717 = vmatpush.msra.mxu0 %v285
  %1718 = vmatpush.msra.mxu0 %v284
  %1719 = vmatpush.msra.mxu0 %v283
  %1720 = vmatpush.msra.mxu0 %v282
  %1721 = vmatpush.msra.mxu0 %v281
  %1722 = vmatpush.msra.mxu0 %v280
  %1723 = vmatpush.msra.mxu0 %v279
  %1724 = vmatpush.msra.mxu0 %v278
  %1725 = vmatpush.msra.mxu0 %v277
  %1726 = vmatpush.msra.mxu0 %v276
  %1727 = vmatpush.msra.mxu0 %v275
  %1728 = vmatpush.msra.mxu0 %v274
  %1729 = vmatpush.msra.mxu0 %v273
  %1730 = vmatpush.msra.mxu0 %v272
  %1731 = vmatpush.msra.mxu0 %v271
  %1732 = vmatpush.msra.mxu0 %v270
  %1733 = vmatmul.f32.gmra.mxu0 %v1644
  %v1734 = vpop.f32.mrf.mxu0
  %v1735 = vadd.f32 0.0, %v1734
  %1736 = vdwg.mxu0
  %1737 = vmatpush.msra.mxu0 %v285
  %1738 = vmatpush.msra.mxu0 %v284
  %1739 = vmatpush.msra.mxu0 %v283
  %1740 = vmatpush.msra.mxu0 %v282
  %1741 = vmatpush.msra.mxu0 %v281
  %1742 = vmatpush.msra.mxu0 %v280
  %1743 = vmatpush.msra.mxu0 %v279
  %1744 = vmatpush.msra.mxu0 %v278
  %1745 = vmatpush.msra.mxu0 %v277
  %1746 = vmatpush.msra.mxu0 %v276
  %1747 = vmatpush.msra.mxu0 %v275
  %1748 = vmatpush.msra.mxu0 %v274
  %1749 = vmatpush.msra.mxu0 %v273
  %1750 = vmatpush.msra.mxu0 %v272
  %1751 = vmatpush.msra.mxu0 %v271
  %1752 = vmatpush.msra.mxu0 %v270
  %1753 = vmatmul.f32.gmra.mxu0 %v1716
  %v1754 = vpop.f32.mrf.mxu0
  %v1755 = vadd.f32 0.0, %v1754
  %1756 = vdwg.mxu0
  %v1757 = vmul.f32 %v1735, 0.001953125
  %v1758 = vmul.f32 %v1755, 0.001953125
  %v1759 = vmul.f32 %v1757, %v1757
  %v1760 = vsub.f32 %v1758, %v1759
  %v1761 = vld [vmem:[%s5] sm:$0x1]
  %v1762 = vadd.f32 %v1760, 1e-05
  %v1763 = vrsqrt.pop %v1762
  %v1764 = vmul.f32 %v1763, %v1762
  %v1765 = vmul.f32 %v1764, %v1763
  %v1766 = vmul.f32 0.5, %v1765
  %v1767 = vsub.f32 1.5, %v1766
  %v1768 = vmul.f32 %v1763, %v1767
  %vm1769 = vweird.f32 %v1762
  %vm1770 = vweird.f32 %v1763
  %vm1771 = vmor %vm1769, %vm1770
  %v1772 = vsel %vm1771, %v1763, %v1768
  %v1773 = vmul.f32 %v1761, %v1772
  %v1774 = vld [vmem:[%s6] sm:$0x1]
  %v1775 = vmul.f32 %v1757, %v1773
  %v1776 = vsub.f32 %v1774, %v1775
  %v1778 = vsel %vm923, %v1773, 0
  %1780 = vmatpush.msra.mxu0 0.0
  %1781 = vmatpush.msra.mxu0 0.0
  %1782 = vmatpush.msra.mxu0 0.0
  %1783 = vmatpush.msra.mxu0 0.0
  %1784 = vmatpush.msra.mxu0 0.0
  %1785 = vmatpush.msra.mxu0 0.0
  %1786 = vmatpush.msra.mxu0 0.0
  %1787 = vmatpush.msra.mxu0 0.0
  %1788 = vmatpush.msra.mxu0 0.0
  %1789 = vmatpush.msra.mxu0 0.0
  %1790 = vmatpush.msra.mxu0 0.0
  %1791 = vmatpush.msra.mxu0 0.0
  %1792 = vmatpush.msra.mxu0 0.0
  %1793 = vmatpush.msra.mxu0 0.0
  %1794 = vmatpush.msra.mxu0 0.0
  %1795 = vmatpush.msra.mxu0 %v300
  %1796 = vmatmul.f32.gmra.mxu0 %v1778
  %v1797 = vpop.f32.mrf.mxu0
  %v1798 = vadd.f32 0.0, %v1797
  %1799 = vdwg.mxu0
  %v1801 = vsel %vm923, %v1776, 0
  %1803 = vmatpush.msra.mxu0 0.0
  %1804 = vmatpush.msra.mxu0 0.0
  %1805 = vmatpush.msra.mxu0 0.0
  %1806 = vmatpush.msra.mxu0 0.0
  %1807 = vmatpush.msra.mxu0 0.0
  %1808 = vmatpush.msra.mxu0 0.0
  %1809 = vmatpush.msra.mxu0 0.0
  %1810 = vmatpush.msra.mxu0 0.0
  %1811 = vmatpush.msra.mxu0 0.0
  %1812 = vmatpush.msra.mxu0 0.0
  %1813 = vmatpush.msra.mxu0 0.0
  %1814 = vmatpush.msra.mxu0 0.0
  %1815 = vmatpush.msra.mxu0 0.0
  %1816 = vmatpush.msra.mxu0 0.0
  %1817 = vmatpush.msra.mxu0 0.0
  %1818 = vmatpush.msra.mxu0 %v300
  %1819 = vmatmul.f32.gmra.mxu0 %v1801
  %v1820 = vpop.f32.mrf.mxu0
  %v1821 = vadd.f32 0.0, %v1820
  %1822 = vdwg.mxu0
  %v1823 = vperm.slane %v1798, 0
  %v1825 = vrot.slane %v1823, 2
  %v1826 = vrot.slane %v1823, 4
  %v1827 = vrot.slane %v1823, 6
  %v1831 = vmul.f32 %v1573, %v1823
  %v1832 = vmul.f32 %v1574, %v1825
  %v1833 = vmul.f32 %v1575, %v1826
  %v1834 = vmul.f32 %v1576, %v1827
  %v1835 = vmul.f32 %v1577, %v1823
  %v1836 = vmul.f32 %v1578, %v1825
  %v1837 = vmul.f32 %v1579, %v1826
  %v1838 = vmul.f32 %v1580, %v1827
  %v1839 = vmul.f32 %v1581, %v1823
  %v1840 = vmul.f32 %v1582, %v1825
  %v1841 = vmul.f32 %v1583, %v1826
  %v1842 = vmul.f32 %v1584, %v1827
  %v1843 = vmul.f32 %v1585, %v1823
  %v1844 = vmul.f32 %v1586, %v1825
  %v1845 = vmul.f32 %v1587, %v1826
  %v1846 = vmul.f32 %v1588, %v1827
  %v1847 = vperm.slane %v1821, 0
  %v1849 = vrot.slane %v1847, 2
  %v1850 = vrot.slane %v1847, 4
  %v1851 = vrot.slane %v1847, 6
  %v1855 = vadd.f32 %v1831, %v1847
  %v1856 = vadd.f32 %v1832, %v1849
  %v1857 = vadd.f32 %v1833, %v1850
  %v1858 = vadd.f32 %v1834, %v1851
  %v1859 = vadd.f32 %v1835, %v1847
  %v1860 = vadd.f32 %v1836, %v1849
  %v1861 = vadd.f32 %v1837, %v1850
  %v1862 = vadd.f32 %v1838, %v1851
  %v1863 = vadd.f32 %v1839, %v1847
  %v1864 = vadd.f32 %v1840, %v1849
  %v1865 = vadd.f32 %v1841, %v1850
  %v1866 = vadd.f32 %v1842, %v1851
  %v1867 = vadd.f32 %v1843, %v1847
  %v1868 = vadd.f32 %v1844, %v1849
  %v1869 = vadd.f32 %v1845, %v1850
  %v1870 = vadd.f32 %v1846, %v1851
  %v1871 = vmax.f32 %v1855, 0.0
  %v1872 = vmax.f32 %v1856, 0.0
  %v1873 = vmax.f32 %v1857, 0.0
  %v1874 = vmax.f32 %v1858, 0.0
  %v1875 = vmax.f32 %v1859, 0.0
  %v1876 = vmax.f32 %v1860, 0.0
  %v1877 = vmax.f32 %v1861, 0.0
  %v1878 = vmax.f32 %v1862, 0.0
  %v1879 = vmax.f32 %v1863, 0.0
  %v1880 = vmax.f32 %v1864, 0.0
  %v1881 = vmax.f32 %v1865, 0.0
  %v1882 = vmax.f32 %v1866, 0.0
  %v1883 = vmax.f32 %v1867, 0.0
  %v1884 = vmax.f32 %v1868, 0.0
  %v1885 = vmax.f32 %v1869, 0.0
  %v1886 = vmax.f32 %v1870, 0.0
  %1903 = vst [vmem:[#allocation1] ss:$4 sm:$0xff] %v1871
  %s1904 = scalar_lea.vmem [#allocation1], 1
  %1905 = vst [vmem:[%s1904] ss:$4 sm:$0xff] %v1872
  %s1906 = scalar_lea.vmem [#allocation1], 2
  %1907 = vst [vmem:[%s1906] ss:$4 sm:$0xff] %v1873
  %s1908 = scalar_lea.vmem [#allocation1], 3
  %1909 = vst [vmem:[%s1908] ss:$4 sm:$0xff] %v1874
  %s1910 = scalar_lea.vmem [#allocation1], 32
  %1911 = vst [vmem:[%s1910] ss:$4 sm:$0xff] %v1875
  %s1912 = scalar_lea.vmem [#allocation1], 33
  %1913 = vst [vmem:[%s1912] ss:$4 sm:$0xff] %v1876
  %s1914 = scalar_lea.vmem [#allocation1], 34
  %1915 = vst [vmem:[%s1914] ss:$4 sm:$0xff] %v1877
  %s1916 = scalar_lea.vmem [#allocation1], 35
  %1917 = vst [vmem:[%s1916] ss:$4 sm:$0xff] %v1878
  %v1918 = vld.sshfl [vmem:[#allocation1] sm:$0xff pattern:$0x73625140]
  %v1919 = vld.sshfl [vmem:[#allocation1 + $0x20] sm:$0xff pattern:$0x73625140]
  %1920 = vst [vmem:[#allocation1] ss:$4 sm:$0xff] %v1879
  %1921 = vst [vmem:[%s1904] ss:$4 sm:$0xff] %v1880
  %1922 = vst [vmem:[%s1906] ss:$4 sm:$0xff] %v1881
  %1923 = vst [vmem:[%s1908] ss:$4 sm:$0xff] %v1882
  %1924 = vst [vmem:[%s1910] ss:$4 sm:$0xff] %v1883
  %1925 = vst [vmem:[%s1912] ss:$4 sm:$0xff] %v1884
  %1926 = vst [vmem:[%s1914] ss:$4 sm:$0xff] %v1885
  %1927 = vst [vmem:[%s1916] ss:$4 sm:$0xff] %v1886
  %v1928 = vld.sshfl [vmem:[#allocation1] sm:$0xff pattern:$0x73625140]
  %v1929 = vld.sshfl [vmem:[#allocation1 + $0x20] sm:$0xff pattern:$0x73625140]
  %1934 = vst [vmem:[%s7] sm:$0xff] %v1918
  %1935 = vst [vmem:[%s7 + $0x8] sm:$0xff] %v1919
  %1936 = vst [vmem:[%s7 + $0x10] sm:$0xff] %v1928
  %1937 = vst [vmem:[%s7 + $0x18] sm:$0xff] %v1929
  // Predicated region
  $region30: #{unet_block_forward.1} parent=0 // pred_check
    _
  $region31: #{unet_block_forward.1} parent=0 // pred_check_branch
    %1939 = sbr.rel (0) target = $region33
  $region32: #{unet_block_forward.1} parent=0 // pred_region
    _
  $region33: #{unet_block_forward.1} parent=0 // pred_fallthru
    _
  // Predicated region
  $region34: #{unet_block_forward.1} parent=0 // pred_check
    _
  $region35: #{unet_block_forward.1} parent=0 // pred_check_branch
    %1941 = sbr.rel (0) target = $region37
  $region36: #{unet_block_forward.1} parent=0 // pred_region
    _
  $region37: #{unet_block_forward.1} parent=0 // pred_fallthru
    _

</llo_original>
